<compile_context>
chip_gen: v7x
topology: tpu7x:2x2x1
jax: 0.10.0
libtpu: 0.0.40
codegen_flags: <defaults>
</compile_context>

<pallas_src>
import functools

import jax
import jax.numpy as jnp
from jax import lax
from jax.experimental import pallas as pl
from jax.experimental.pallas import tpu as pltpu

EPS = 1e-12   # torch.nn.functional.normalize default eps
LANE = 128    # TPU lane width: cos output padded to a multiple of this


def _round_up(x, m):
    return ((x + m - 1) // m) * m


# --------------------------------------------------------------------------
# Pallas kernel: one invocation covers every layer (static unrolled loop)
# --------------------------------------------------------------------------
def _l2ppp_fused_kernel(x_ref, k_ref, a_ref, cos_ref, loss_ref, *,
                        nL, B, P, D, P_pad, task_count, top_k, mxu_dtype):
    s0 = task_count * top_k
    s1 = s0 + top_k

    def ddot(a, b):
        # contract on the trailing feature dim of both operands (a @ b.T)
        return lax.dot_general(a.astype(mxu_dtype), b.astype(mxu_dtype),
                               (((1,), (1,)), ((), ())),
                               preferred_element_type=jnp.float32)

    def l2norm(t):
        nrm = jnp.sqrt(jnp.sum(t * t, axis=1, keepdims=True))
        return t / jnp.maximum(nrm, EPS)

    # (P, P) masks for the Gram-matrix penalties (built once, reused per layer)
    rows = lax.broadcasted_iota(jnp.int32, (P, P), 0)
    cols = lax.broadcasted_iota(jnp.int32, (P, P), 1)
    eye = (rows == cols).astype(jnp.float32)
    cur_block = (rows >= s0) & (rows < s1) & (cols >= s0) & (cols < s1)
    prev_cur = (rows < s0) & (cols >= s0) & (cols < s1)

    # (B, P_pad) lane mask for the prompt-selection loss (reuses live cos vreg)
    pcol = lax.broadcasted_iota(jnp.int32, (B, P_pad), 1)
    sel_mask = (pcol >= s0) & (pcol < s1)

    p_sum = jnp.float32(0.0)
    o_sum = jnp.float32(0.0)
    td_sum = jnp.float32(0.0)

    for l in range(nL):                      # nL is small & static -> unroll
        xl = x_ref[:, l, :]                  # (B, D) query for this layer
        Kl = k_ref[l]                        # (P, D) e_k_l
        Al = a_ref[l]                        # (P, D) e_a_l

        n_K = l2norm(Kl)
        n_A = l2norm(Al)

        # masked-query cosine similarity:
        #   cos[b,k] = <x_b * A_k, n_K_k> / max(||x_b * A_k||, eps)
        M = Al * n_K                         # (P, D)
        A2 = Al * Al                         # (P, D)
        if P_pad > P:                        # zero-pad pool dim -> lane-dense
            zpad = jnp.zeros((P_pad - P, D), jnp.float32)
            Mp = jnp.concatenate([M, zpad], axis=0)      # (P_pad, D)
            A2p = jnp.concatenate([A2, zpad], axis=0)
        else:
            Mp, A2p = M, A2

        num = ddot(xl, Mp)                   # (B, P_pad)
        den = jnp.sqrt(ddot(xl * xl, A2p))   # (B, P_pad); padded cols -> 0
        cos_pad = num / jnp.maximum(den, EPS)
        cos_ref[l] = cos_pad                 # unmasked, lane-dense store

        # prompt-selection loss on the current task's slots (lane mask)
        p_sum += jnp.sum(jnp.where(sel_mask, 1.0 - cos_pad, 0.0))

        # full PxP Gram matrices once; penalties via masked reductions
        G_K = ddot(n_K, n_K)                 # (P, P)
        G_A = ddot(n_A, n_A)
        dK = G_K - eye
        dA = G_A - eye
        o_sum += (jnp.sum(jnp.where(cur_block, dK * dK, 0.0)) +
                  jnp.sum(jnp.where(cur_block, dA * dA, 0.0))) \
                 / float(top_k * top_k) * 1e-6

        if task_count > 0:                   # task-disjoint orthogonality
            td_sum += (jnp.sum(jnp.where(prev_cur, G_K * G_K, 0.0)) +
                       jnp.sum(jnp.where(prev_cur, G_A * G_A, 0.0))) \
                      / float(s0 * top_k)

    # single write per loss at the very end
    loss_ref[0] = p_sum
    loss_ref[1] = o_sum
    loss_ref[2] = td_sum


def l2ppp_prompt_losses(x_query, K_all, A_all, *, task_count, top_k,
                        mxu_dtype=jnp.float32):
    """x_query: (B, nL, D).  Returns (cos_pad (nL,B,P_pad), losses (3,))
    where losses = [sum p_loss, sum ortho_loss, sum td_loss] over layers."""
    B, nL, D = x_query.shape
    P = K_all.shape[1]
    P_pad = max(_round_up(P, LANE), LANE)

    kernel = functools.partial(
        _l2ppp_fused_kernel, nL=nL, B=B, P=P, D=D, P_pad=P_pad,
        task_count=task_count, top_k=top_k, mxu_dtype=mxu_dtype)

    flops = nL * (4 * B * D * P_pad + 4 * P * P * D)
    bytes_accessed = 4 * (B * nL * D + 2 * nL * P * D + nL * B * P_pad + 3)
    # VMEM budget check (conservative even for v7x's 64 MiB / 32 MiB scoped):
    vmem_need = 4 * (B * nL * D + 2 * nL * P * D + nL * B * P_pad)
    vmem_limit = int(min(max(4 * vmem_need + (4 << 20), 8 << 20), 32 << 20))

    cos_pad, losses = pl.pallas_call(
        kernel,
        out_shape=(
            jax.ShapeDtypeStruct((nL, B, P_pad), jnp.float32),
            jax.ShapeDtypeStruct((3,), jnp.float32),
        ),
        in_specs=[pl.BlockSpec(memory_space=pltpu.VMEM)] * 3,
        out_specs=(
            pl.BlockSpec(memory_space=pltpu.VMEM),
            pl.BlockSpec(memory_space=pltpu.SMEM),
        ),
        compiler_params=pltpu.CompilerParams(vmem_limit_bytes=vmem_limit),
        cost_estimate=pl.CostEstimate(
            flops=flops, transcendentals=0, bytes_accessed=bytes_accessed),
    )(x_query, K_all, A_all)
    return cos_pad, losses


# --------------------------------------------------------------------------
# Full forward (train and eval paths); prompt gather is plain-JAX glue
# --------------------------------------------------------------------------
def l2ppp_mask_se_orth_to_forward(x_query, K_all, A_all, P_all, *,
                                  task_count, top_k, loss_weight,
                                  orth_mu, to_mu, train=True,
                                  mxu_dtype=jnp.float32):
    B, nL, C = x_query.shape
    nL_, P, Lp, emb_d = P_all.shape

    cos_pad, losses = l2ppp_prompt_losses(
        x_query, K_all, A_all, task_count=task_count, top_k=top_k,
        mxu_dtype=mxu_dtype)

    if train:
        p_loss = losses[0] * loss_weight
        orth_loss = losses[1] * orth_mu + losses[2] * to_mu
        s0, s1 = task_count * top_k, (task_count + 1) * top_k
        # p[s0:s1].flatten(0,1).unsqueeze(0).expand(B,-1,-1), stacked over layers
        P_sel = P_all[:, s0:s1].reshape(nL, 1, top_k * Lp, emb_d)
        p_return = jnp.broadcast_to(P_sel, (nL, B, top_k * Lp, emb_d))
        return p_return, [p_loss, orth_loss]
    else:
        cos = cos_pad[:, :, :P]
        n_tasks = P // top_k
        per_task = cos.reshape(nL, B, n_tasks, top_k).sum(-1).sum(1)
        task_ids = jnp.argmax(per_task, axis=-1)              # (nL,)
        idx = task_ids[:, None] * top_k + jnp.arange(top_k)[None, :]
        P_sel = jax.vmap(lambda p, i: p[i])(P_all, idx)       # (nL, top_k, Lp, emb_d)
        P_sel = P_sel.reshape(nL, 1, top_k * Lp, emb_d)
        p_return = jnp.broadcast_to(P_sel, (nL, B, top_k * Lp, emb_d))
        zero = jnp.float32(0.0)
        return p_return, [zero * loss_weight, zero]
    # TODO(synk): vis_period heatmap logging (event storage / image IO) has no
    # Pallas equivalent and is intentionally omitted.


# --------------------------------------------------------------------------
# Pure-JAX reference mirroring the PyTorch math (for self-check)
# --------------------------------------------------------------------------
def _ref_losses(x_query, K_all, A_all, task_count, top_k):
    B, nL, D = x_query.shape
    cos_all, p_sum, o_sum, td_sum = [], 0.0, 0.0, 0.0
    for l in range(nL):
        K, A = K_all[l], A_all[l]
        n_A = A / jnp.maximum(jnp.linalg.norm(A, axis=1, keepdims=True), EPS)
        a_query = jnp.einsum('bd,kd->bkd', x_query[:, l], A)
        n_K = K / jnp.maximum(jnp.linalg.norm(K, axis=1, keepdims=True), EPS)
        q = a_query / jnp.maximum(
            jnp.linalg.norm(a_query, axis=2, keepdims=True), EPS)
        cos_sim = jnp.einsum('bkd,kd->bk', q, n_K)
        cos_all.append(cos_sim)
        s0, s1 = task_count * top_k, (task_count + 1) * top_k
        p_sum += jnp.sum(1.0 - cos_sim[:, s0:s1])
        eye = jnp.eye(top_k, dtype=jnp.float32)
        for t in (n_K[s0:s1], n_A[s0:s1]):
            o_sum += jnp.mean((t @ t.T - eye) ** 2) * 1e-6
        if task_count > 0:
            for t in (n_K, n_A):
                td_sum += jnp.mean((t[0:s0] @ t[s0:s1].T) ** 2)
    return jnp.stack(cos_all), p_sum, o_sum, td_sum


if __name__ == "__main__":
    # Module config (small): emb_d=16, key_dim=32, n_tasks=4, topk=2
    # -> pool_size = 8, e_p_length (num_prompts) = 4, nL = 3
    B, nL = 2, 3
    emb_d, key_d = 16, 32
    top_k, n_tasks = 2, 4
    pool = n_tasks * top_k
    Lp = 4
    loss_weight, orth_mu, to_mu = 0.1, 0.1, 0.05
    task_count = 1  # exercises the task-disjoint (TO) penalty branch

    key = jax.random.PRNGKey(0)
    k0, k1, k2, k3 = jax.random.split(key, 4)
    K_all = jax.random.uniform(k0, (nL, pool, key_d), dtype=jnp.float32)
    A_all = jax.random.uniform(k1, (nL, pool, key_d), dtype=jnp.float32)
    P_all = jax.random.uniform(k2, (nL, pool, Lp, emb_d), dtype=jnp.float32)
    x_query = jax.random.normal(k3, (B, nL, key_d), dtype=jnp.float32)

    # --- run the fused Pallas kernel (train path) ---
    p_return, (p_loss, orth_loss) = l2ppp_mask_se_orth_to_forward(
        x_query, K_all, A_all, P_all,
        task_count=task_count, top_k=top_k, loss_weight=loss_weight,
        orth_mu=orth_mu, to_mu=to_mu, train=True)
    jax.block_until_ready((p_return, p_loss, orth_loss))

    # --- verify against pure-JAX reference of the PyTorch math ---
    cos_pad, losses = l2ppp_prompt_losses(
        x_query, K_all, A_all, task_count=task_count, top_k=top_k)
    cos_r, p_r, o_r, td_r = _ref_losses(x_query, K_all, A_all, task_count, top_k)

    P_pad = max(_round_up(pool, LANE), LANE)
    assert p_return.shape == (nL, B, top_k * Lp, emb_d)
    assert cos_pad.shape == (nL, B, P_pad)
    assert jnp.allclose(cos_pad[:, :, :pool], cos_r, rtol=1e-5, atol=1e-5)
    assert jnp.allclose(cos_pad[:, :, pool:], 0.0)
    assert jnp.allclose(losses[0], p_r, rtol=1e-5, atol=1e-5)
    assert jnp.allclose(losses[1], o_r, rtol=1e-5, atol=1e-8)
    assert jnp.allclose(losses[2], td_r, rtol=1e-5, atol=1e-7)
    assert jnp.allclose(p_loss, p_r * loss_weight, rtol=1e-5, atol=1e-5)
    assert jnp.allclose(orth_loss, o_r * orth_mu + td_r * to_mu,
                        rtol=1e-5, atol=1e-7)

    # --- eval path also exercises the kernel's cos_sim output ---
    p_eval, _ = l2ppp_mask_se_orth_to_forward(
        x_query, K_all, A_all, P_all,
        task_count=task_count, top_k=top_k, loss_weight=loss_weight,
        orth_mu=orth_mu, to_mu=to_mu, train=False)
    jax.block_until_ready(p_eval)
    assert p_eval.shape == (nL, B, top_k * Lp, emb_d)

    # --- bf16 MXU-input variant (perf option for v6e/v7x), loose tolerance ---
    cos_bf, losses_bf = l2ppp_prompt_losses(
        x_query, K_all, A_all, task_count=task_count, top_k=top_k,
        mxu_dtype=jnp.bfloat16)
    jax.block_until_ready((cos_bf, losses_bf))
    assert jnp.allclose(cos_bf[:, :, :pool], cos_r, rtol=5e-2, atol=5e-2)
    assert bool(jnp.all(jnp.isfinite(losses_bf)))

    print("KERNEL_OK")
</pallas_src>

<mosaic_0001>
module attributes {stable_mosaic.version = 11 : i64} {
  func.func @_l2ppp_fused_kernel(%arg0: memref<2x3x32xf32, #tpu.memory_space<vmem>>, %arg1: memref<3x8x32xf32, #tpu.memory_space<vmem>>, %arg2: memref<3x8x32xf32, #tpu.memory_space<vmem>>, %arg3: memref<3x2x128xf32, #tpu.memory_space<vmem>>, %arg4: memref<3xf32, #tpu.memory_space<smem>>) attributes {dimension_semantics = [], scalar_prefetch = 0 : i64, scratch_operands = 0 : i64, tpu.core_type = #tpu.core_type<tc>} {
    %0 = tpu.iota {dimensions = array<i32: 0>} : vector<8x8xi32>
    %1 = tpu.iota {dimensions = array<i32: 1>} : vector<8x8xi32>
    %2 = arith.cmpi eq, %0, %1 : vector<8x8xi32>
    %3 = arith.extui %2 : vector<8x8xi1> to vector<8x8xi32>
    %4 = arith.sitofp %3 : vector<8x8xi32> to vector<8x8xf32>
    %c2_i32 = arith.constant 2 : i32
    %5 = vector.broadcast %c2_i32 : i32 to vector<8x8xi32>
    %6 = arith.cmpi sge, %0, %5 : vector<8x8xi32>
    %c4_i32 = arith.constant 4 : i32
    %7 = vector.broadcast %c4_i32 : i32 to vector<8x8xi32>
    %8 = arith.cmpi slt, %0, %7 : vector<8x8xi32>
    %9 = arith.andi %6, %8 : vector<8x8xi1>
    %c2_i32_0 = arith.constant 2 : i32
    %10 = vector.broadcast %c2_i32_0 : i32 to vector<8x8xi32>
    %11 = arith.cmpi sge, %1, %10 : vector<8x8xi32>
    %12 = arith.andi %9, %11 : vector<8x8xi1>
    %c4_i32_1 = arith.constant 4 : i32
    %13 = vector.broadcast %c4_i32_1 : i32 to vector<8x8xi32>
    %14 = arith.cmpi slt, %1, %13 : vector<8x8xi32>
    %15 = arith.andi %12, %14 : vector<8x8xi1>
    %c2_i32_2 = arith.constant 2 : i32
    %16 = vector.broadcast %c2_i32_2 : i32 to vector<8x8xi32>
    %17 = arith.cmpi slt, %0, %16 : vector<8x8xi32>
    %c2_i32_3 = arith.constant 2 : i32
    %18 = vector.broadcast %c2_i32_3 : i32 to vector<8x8xi32>
    %19 = arith.cmpi sge, %1, %18 : vector<8x8xi32>
    %20 = arith.andi %17, %19 : vector<8x8xi1>
    %c4_i32_4 = arith.constant 4 : i32
    %21 = vector.broadcast %c4_i32_4 : i32 to vector<8x8xi32>
    %22 = arith.cmpi slt, %1, %21 : vector<8x8xi32>
    %23 = arith.andi %20, %22 : vector<8x8xi1>
    %24 = tpu.iota {dimensions = array<i32: 1>} : vector<2x128xi32>
    %c2_i32_5 = arith.constant 2 : i32
    %25 = vector.broadcast %c2_i32_5 : i32 to vector<2x128xi32>
    %26 = arith.cmpi sge, %24, %25 : vector<2x128xi32>
    %c4_i32_6 = arith.constant 4 : i32
    %27 = vector.broadcast %c4_i32_6 : i32 to vector<2x128xi32>
    %28 = arith.cmpi slt, %24, %27 : vector<2x128xi32>
    %29 = arith.andi %26, %28 : vector<2x128xi1>
    %c0 = arith.constant 0 : index
    %c0_7 = arith.constant 0 : index
    %c0_8 = arith.constant 0 : index
    %30 = vector.load %arg0[%c0, %c0_7, %c0_8] : memref<2x3x32xf32, #tpu.memory_space<vmem>>, vector<2x1x32xf32>
    %31 = vector.shape_cast %30 : vector<2x1x32xf32> to vector<2x32xf32>
    %c0_9 = arith.constant 0 : index
    %c0_10 = arith.constant 0 : index
    %c0_11 = arith.constant 0 : index
    %32 = vector.load %arg1[%c0_9, %c0_10, %c0_11] : memref<3x8x32xf32, #tpu.memory_space<vmem>>, vector<1x8x32xf32>
    %33 = vector.shape_cast %32 : vector<1x8x32xf32> to vector<8x32xf32>
    %c0_12 = arith.constant 0 : index
    %c0_13 = arith.constant 0 : index
    %c0_14 = arith.constant 0 : index
    %34 = vector.load %arg2[%c0_12, %c0_13, %c0_14] : memref<3x8x32xf32, #tpu.memory_space<vmem>>, vector<1x8x32xf32>
    %35 = vector.shape_cast %34 : vector<1x8x32xf32> to vector<8x32xf32>
    %36 = arith.mulf %33, %33 : vector<8x32xf32>
    %cst = arith.constant dense<0.000000e+00> : vector<8xf32>
    %37 = vector.multi_reduction <add>, %36, %cst [1] : vector<8x32xf32> to vector<8xf32>
    %38 = vector.shape_cast %37 : vector<8xf32> to vector<8x1xf32>
    %39 = math.sqrt %38 : vector<8x1xf32>
    %cst_15 = arith.constant 9.99999996E-13 : f32
    %40 = vector.broadcast %cst_15 : f32 to vector<8x1xf32>
    %41 = arith.maximumf %39, %40 : vector<8x1xf32>
    %42 = vector.broadcast %41 : vector<8x1xf32> to vector<8x32xf32>
    %43 = arith.divf %33, %42 : vector<8x32xf32>
    %44 = arith.mulf %35, %35 : vector<8x32xf32>
    %cst_16 = arith.constant dense<0.000000e+00> : vector<8xf32>
    %45 = vector.multi_reduction <add>, %44, %cst_16 [1] : vector<8x32xf32> to vector<8xf32>
    %46 = vector.shape_cast %45 : vector<8xf32> to vector<8x1xf32>
    %47 = math.sqrt %46 : vector<8x1xf32>
    %cst_17 = arith.constant 9.99999996E-13 : f32
    %48 = vector.broadcast %cst_17 : f32 to vector<8x1xf32>
    %49 = arith.maximumf %47, %48 : vector<8x1xf32>
    %50 = vector.broadcast %49 : vector<8x1xf32> to vector<8x32xf32>
    %51 = arith.divf %35, %50 : vector<8x32xf32>
    %52 = arith.mulf %35, %43 : vector<8x32xf32>
    %53 = arith.mulf %35, %35 : vector<8x32xf32>
    %cst_18 = arith.constant 0.000000e+00 : f32
    %54 = vector.broadcast %cst_18 : f32 to vector<120x32xf32>
    %55 = tpu.concatenate %52, %54 in 0 : vector<8x32xf32>, vector<120x32xf32> -> vector<128x32xf32>
    %56 = tpu.concatenate %53, %54 in 0 : vector<8x32xf32>, vector<120x32xf32> -> vector<128x32xf32>
    %cst_19 = arith.constant dense<0.000000e+00> : vector<2x128xf32>
    %57 = tpu.matmul %31, %55, %cst_19 {dimension_numbers = #tpu.dot_dimension_numbers<[1], [1], [0], [0], [0, 0, 1, 0], [], []>} : vector<2x32xf32>, vector<128x32xf32>, vector<2x128xf32> -> vector<2x128xf32>
    %58 = arith.mulf %31, %31 : vector<2x32xf32>
    %cst_20 = arith.constant dense<0.000000e+00> : vector<2x128xf32>
    %59 = tpu.matmul %58, %56, %cst_20 {dimension_numbers = #tpu.dot_dimension_numbers<[1], [1], [0], [0], [0, 0, 1, 0], [], []>} : vector<2x32xf32>, vector<128x32xf32>, vector<2x128xf32> -> vector<2x128xf32>
    %60 = math.sqrt %59 : vector<2x128xf32>
    %cst_21 = arith.constant 9.99999996E-13 : f32
    %61 = vector.broadcast %cst_21 : f32 to vector<2x128xf32>
    %62 = arith.maximumf %60, %61 : vector<2x128xf32>
    %63 = arith.divf %57, %62 : vector<2x128xf32>
    %c0_22 = arith.constant 0 : index
    %c0_23 = arith.constant 0 : index
    %c0_24 = arith.constant 0 : index
    %64 = vector.load %arg3[%c0_22, %c0_23, %c0_24] : memref<3x2x128xf32, #tpu.memory_space<vmem>>, vector<1x2x128xf32>
    %65 = vector.shape_cast %64 : vector<1x2x128xf32> to vector<2x128xf32>
    %66 = vector.shape_cast %63 : vector<2x128xf32> to vector<1x2x128xf32>
    tpu.vector_store %arg3[%c0_22, %c0_23, %c0_24], %66 {strides = array<i32>} : memref<3x2x128xf32, #tpu.memory_space<vmem>>, vector<1x2x128xf32>,
    %cst_25 = arith.constant 1.000000e+00 : f32
    %67 = vector.broadcast %cst_25 : f32 to vector<2x128xf32>
    %68 = arith.subf %67, %63 : vector<2x128xf32>
    %cst_26 = arith.constant 0.000000e+00 : f32
    %69 = vector.broadcast %cst_26 : f32 to vector<2x128xf32>
    %70 = arith.select %29, %68, %69 : vector<2x128xi1>, vector<2x128xf32>
    %71 = vector.shape_cast %70 : vector<2x128xf32> to vector<1x2x128xf32>
    %cst_27 = arith.constant dense<0.000000e+00> : vector<1xf32>
    %72 = vector.multi_reduction <add>, %71, %cst_27 [1, 2] : vector<1x2x128xf32> to vector<1xf32>
    %73 = vector.shape_cast %72 : vector<1xf32> to vector<1x1x1xf32>
    %74 = vector.extract %73[0, 0, 0] : f32 from vector<1x1x1xf32>
    %cst_28 = arith.constant 0.000000e+00 : f32
    %75 = arith.addf %cst_28, %74 : f32
    %cst_29 = arith.constant dense<0.000000e+00> : vector<8x8xf32>
    %76 = tpu.matmul %43, %43, %cst_29 {dimension_numbers = #tpu.dot_dimension_numbers<[1], [1], [0], [0], [0, 0, 1, 0], [], []>} : vector<8x32xf32>, vector<8x32xf32>, vector<8x8xf32> -> vector<8x8xf32>
    %cst_30 = arith.constant dense<0.000000e+00> : vector<8x8xf32>
    %77 = tpu.matmul %51, %51, %cst_30 {dimension_numbers = #tpu.dot_dimension_numbers<[1], [1], [0], [0], [0, 0, 1, 0], [], []>} : vector<8x32xf32>, vector<8x32xf32>, vector<8x8xf32> -> vector<8x8xf32>
    %78 = arith.subf %76, %4 : vector<8x8xf32>
    %79 = arith.subf %77, %4 : vector<8x8xf32>
    %80 = arith.mulf %78, %78 : vector<8x8xf32>
    %cst_31 = arith.constant 0.000000e+00 : f32
    %81 = vector.broadcast %cst_31 : f32 to vector<8x8xf32>
    %82 = arith.select %15, %80, %81 : vector<8x8xi1>, vector<8x8xf32>
    %83 = vector.shape_cast %82 : vector<8x8xf32> to vector<1x8x8xf32>
    %cst_32 = arith.constant dense<0.000000e+00> : vector<1xf32>
    %84 = vector.multi_reduction <add>, %83, %cst_32 [1, 2] : vector<1x8x8xf32> to vector<1xf32>
    %85 = vector.shape_cast %84 : vector<1xf32> to vector<1x1x1xf32>
    %86 = vector.extract %85[0, 0, 0] : f32 from vector<1x1x1xf32>
    %87 = arith.mulf %79, %79 : vector<8x8xf32>
    %cst_33 = arith.constant 0.000000e+00 : f32
    %88 = vector.broadcast %cst_33 : f32 to vector<8x8xf32>
    %89 = arith.select %15, %87, %88 : vector<8x8xi1>, vector<8x8xf32>
    %90 = vector.shape_cast %89 : vector<8x8xf32> to vector<1x8x8xf32>
    %cst_34 = arith.constant dense<0.000000e+00> : vector<1xf32>
    %91 = vector.multi_reduction <add>, %90, %cst_34 [1, 2] : vector<1x8x8xf32> to vector<1xf32>
    %92 = vector.shape_cast %91 : vector<1xf32> to vector<1x1x1xf32>
    %93 = vector.extract %92[0, 0, 0] : f32 from vector<1x1x1xf32>
    %94 = arith.addf %86, %93 : f32
    %cst_35 = arith.constant 4.000000e+00 : f32
    %95 = arith.divf %94, %cst_35 : f32
    %cst_36 = arith.constant 9.99999997E-7 : f32
    %96 = arith.mulf %95, %cst_36 : f32
    %cst_37 = arith.constant 0.000000e+00 : f32
    %97 = arith.addf %cst_37, %96 : f32
    %98 = arith.mulf %76, %76 : vector<8x8xf32>
    %cst_38 = arith.constant 0.000000e+00 : f32
    %99 = vector.broadcast %cst_38 : f32 to vector<8x8xf32>
    %100 = arith.select %23, %98, %99 : vector<8x8xi1>, vector<8x8xf32>
    %101 = vector.shape_cast %100 : vector<8x8xf32> to vector<1x8x8xf32>
    %cst_39 = arith.constant dense<0.000000e+00> : vector<1xf32>
    %102 = vector.multi_reduction <add>, %101, %cst_39 [1, 2] : vector<1x8x8xf32> to vector<1xf32>
    %103 = vector.shape_cast %102 : vector<1xf32> to vector<1x1x1xf32>
    %104 = vector.extract %103[0, 0, 0] : f32 from vector<1x1x1xf32>
    %105 = arith.mulf %77, %77 : vector<8x8xf32>
    %cst_40 = arith.constant 0.000000e+00 : f32
    %106 = vector.broadcast %cst_40 : f32 to vector<8x8xf32>
    %107 = arith.select %23, %105, %106 : vector<8x8xi1>, vector<8x8xf32>
    %108 = vector.shape_cast %107 : vector<8x8xf32> to vector<1x8x8xf32>
    %cst_41 = arith.constant dense<0.000000e+00> : vector<1xf32>
    %109 = vector.multi_reduction <add>, %108, %cst_41 [1, 2] : vector<1x8x8xf32> to vector<1xf32>
    %110 = vector.shape_cast %109 : vector<1xf32> to vector<1x1x1xf32>
    %111 = vector.extract %110[0, 0, 0] : f32 from vector<1x1x1xf32>
    %112 = arith.addf %104, %111 : f32
    %cst_42 = arith.constant 4.000000e+00 : f32
    %113 = arith.divf %112, %cst_42 : f32
    %cst_43 = arith.constant 0.000000e+00 : f32
    %114 = arith.addf %cst_43, %113 : f32
    %c0_44 = arith.constant 0 : index
    %c1 = arith.constant 1 : index
    %c0_45 = arith.constant 0 : index
    %115 = vector.load %arg0[%c0_44, %c1, %c0_45] : memref<2x3x32xf32, #tpu.memory_space<vmem>>, vector<2x1x32xf32>
    %116 = vector.shape_cast %115 : vector<2x1x32xf32> to vector<2x32xf32>
    %c1_46 = arith.constant 1 : index
    %c0_47 = arith.constant 0 : index
    %c0_48 = arith.constant 0 : index
    %117 = vector.load %arg1[%c1_46, %c0_47, %c0_48] : memref<3x8x32xf32, #tpu.memory_space<vmem>>, vector<1x8x32xf32>
    %118 = vector.shape_cast %117 : vector<1x8x32xf32> to vector<8x32xf32>
    %c1_49 = arith.constant 1 : index
    %c0_50 = arith.constant 0 : index
    %c0_51 = arith.constant 0 : index
    %119 = vector.load %arg2[%c1_49, %c0_50, %c0_51] : memref<3x8x32xf32, #tpu.memory_space<vmem>>, vector<1x8x32xf32>
    %120 = vector.shape_cast %119 : vector<1x8x32xf32> to vector<8x32xf32>
    %121 = arith.mulf %118, %118 : vector<8x32xf32>
    %cst_52 = arith.constant dense<0.000000e+00> : vector<8xf32>
    %122 = vector.multi_reduction <add>, %121, %cst_52 [1] : vector<8x32xf32> to vector<8xf32>
    %123 = vector.shape_cast %122 : vector<8xf32> to vector<8x1xf32>
    %124 = math.sqrt %123 : vector<8x1xf32>
    %cst_53 = arith.constant 9.99999996E-13 : f32
    %125 = vector.broadcast %cst_53 : f32 to vector<8x1xf32>
    %126 = arith.maximumf %124, %125 : vector<8x1xf32>
    %127 = vector.broadcast %126 : vector<8x1xf32> to vector<8x32xf32>
    %128 = arith.divf %118, %127 : vector<8x32xf32>
    %129 = arith.mulf %120, %120 : vector<8x32xf32>
    %cst_54 = arith.constant dense<0.000000e+00> : vector<8xf32>
    %130 = vector.multi_reduction <add>, %129, %cst_54 [1] : vector<8x32xf32> to vector<8xf32>
    %131 = vector.shape_cast %130 : vector<8xf32> to vector<8x1xf32>
    %132 = math.sqrt %131 : vector<8x1xf32>
    %cst_55 = arith.constant 9.99999996E-13 : f32
    %133 = vector.broadcast %cst_55 : f32 to vector<8x1xf32>
    %134 = arith.maximumf %132, %133 : vector<8x1xf32>
    %135 = vector.broadcast %134 : vector<8x1xf32> to vector<8x32xf32>
    %136 = arith.divf %120, %135 : vector<8x32xf32>
    %137 = arith.mulf %120, %128 : vector<8x32xf32>
    %138 = arith.mulf %120, %120 : vector<8x32xf32>
    %cst_56 = arith.constant 0.000000e+00 : f32
    %139 = vector.broadcast %cst_56 : f32 to vector<120x32xf32>
    %140 = tpu.concatenate %137, %139 in 0 : vector<8x32xf32>, vector<120x32xf32> -> vector<128x32xf32>
    %141 = tpu.concatenate %138, %139 in 0 : vector<8x32xf32>, vector<120x32xf32> -> vector<128x32xf32>
    %cst_57 = arith.constant dense<0.000000e+00> : vector<2x128xf32>
    %142 = tpu.matmul %116, %140, %cst_57 {dimension_numbers = #tpu.dot_dimension_numbers<[1], [1], [0], [0], [0, 0, 1, 0], [], []>} : vector<2x32xf32>, vector<128x32xf32>, vector<2x128xf32> -> vector<2x128xf32>
    %143 = arith.mulf %116, %116 : vector<2x32xf32>
    %cst_58 = arith.constant dense<0.000000e+00> : vector<2x128xf32>
    %144 = tpu.matmul %143, %141, %cst_58 {dimension_numbers = #tpu.dot_dimension_numbers<[1], [1], [0], [0], [0, 0, 1, 0], [], []>} : vector<2x32xf32>, vector<128x32xf32>, vector<2x128xf32> -> vector<2x128xf32>
    %145 = math.sqrt %144 : vector<2x128xf32>
    %cst_59 = arith.constant 9.99999996E-13 : f32
    %146 = vector.broadcast %cst_59 : f32 to vector<2x128xf32>
    %147 = arith.maximumf %145, %146 : vector<2x128xf32>
    %148 = arith.divf %142, %147 : vector<2x128xf32>
    %c1_60 = arith.constant 1 : index
    %c0_61 = arith.constant 0 : index
    %c0_62 = arith.constant 0 : index
    %149 = vector.load %arg3[%c1_60, %c0_61, %c0_62] : memref<3x2x128xf32, #tpu.memory_space<vmem>>, vector<1x2x128xf32>
    %150 = vector.shape_cast %149 : vector<1x2x128xf32> to vector<2x128xf32>
    %151 = vector.shape_cast %148 : vector<2x128xf32> to vector<1x2x128xf32>
    tpu.vector_store %arg3[%c1_60, %c0_61, %c0_62], %151 {strides = array<i32>} : memref<3x2x128xf32, #tpu.memory_space<vmem>>, vector<1x2x128xf32>,
    %cst_63 = arith.constant 1.000000e+00 : f32
    %152 = vector.broadcast %cst_63 : f32 to vector<2x128xf32>
    %153 = arith.subf %152, %148 : vector<2x128xf32>
    %cst_64 = arith.constant 0.000000e+00 : f32
    %154 = vector.broadcast %cst_64 : f32 to vector<2x128xf32>
    %155 = arith.select %29, %153, %154 : vector<2x128xi1>, vector<2x128xf32>
    %156 = vector.shape_cast %155 : vector<2x128xf32> to vector<1x2x128xf32>
    %cst_65 = arith.constant dense<0.000000e+00> : vector<1xf32>
    %157 = vector.multi_reduction <add>, %156, %cst_65 [1, 2] : vector<1x2x128xf32> to vector<1xf32>
    %158 = vector.shape_cast %157 : vector<1xf32> to vector<1x1x1xf32>
    %159 = vector.extract %158[0, 0, 0] : f32 from vector<1x1x1xf32>
    %160 = arith.addf %75, %159 : f32
    %cst_66 = arith.constant dense<0.000000e+00> : vector<8x8xf32>
    %161 = tpu.matmul %128, %128, %cst_66 {dimension_numbers = #tpu.dot_dimension_numbers<[1], [1], [0], [0], [0, 0, 1, 0], [], []>} : vector<8x32xf32>, vector<8x32xf32>, vector<8x8xf32> -> vector<8x8xf32>
    %cst_67 = arith.constant dense<0.000000e+00> : vector<8x8xf32>
    %162 = tpu.matmul %136, %136, %cst_67 {dimension_numbers = #tpu.dot_dimension_numbers<[1], [1], [0], [0], [0, 0, 1, 0], [], []>} : vector<8x32xf32>, vector<8x32xf32>, vector<8x8xf32> -> vector<8x8xf32>
    %163 = arith.subf %161, %4 : vector<8x8xf32>
    %164 = arith.subf %162, %4 : vector<8x8xf32>
    %165 = arith.mulf %163, %163 : vector<8x8xf32>
    %cst_68 = arith.constant 0.000000e+00 : f32
    %166 = vector.broadcast %cst_68 : f32 to vector<8x8xf32>
    %167 = arith.select %15, %165, %166 : vector<8x8xi1>, vector<8x8xf32>
    %168 = vector.shape_cast %167 : vector<8x8xf32> to vector<1x8x8xf32>
    %cst_69 = arith.constant dense<0.000000e+00> : vector<1xf32>
    %169 = vector.multi_reduction <add>, %168, %cst_69 [1, 2] : vector<1x8x8xf32> to vector<1xf32>
    %170 = vector.shape_cast %169 : vector<1xf32> to vector<1x1x1xf32>
    %171 = vector.extract %170[0, 0, 0] : f32 from vector<1x1x1xf32>
    %172 = arith.mulf %164, %164 : vector<8x8xf32>
    %cst_70 = arith.constant 0.000000e+00 : f32
    %173 = vector.broadcast %cst_70 : f32 to vector<8x8xf32>
    %174 = arith.select %15, %172, %173 : vector<8x8xi1>, vector<8x8xf32>
    %175 = vector.shape_cast %174 : vector<8x8xf32> to vector<1x8x8xf32>
    %cst_71 = arith.constant dense<0.000000e+00> : vector<1xf32>
    %176 = vector.multi_reduction <add>, %175, %cst_71 [1, 2] : vector<1x8x8xf32> to vector<1xf32>
    %177 = vector.shape_cast %176 : vector<1xf32> to vector<1x1x1xf32>
    %178 = vector.extract %177[0, 0, 0] : f32 from vector<1x1x1xf32>
    %179 = arith.addf %171, %178 : f32
    %cst_72 = arith.constant 4.000000e+00 : f32
    %180 = arith.divf %179, %cst_72 : f32
    %cst_73 = arith.constant 9.99999997E-7 : f32
    %181 = arith.mulf %180, %cst_73 : f32
    %182 = arith.addf %97, %181 : f32
    %183 = arith.mulf %161, %161 : vector<8x8xf32>
    %cst_74 = arith.constant 0.000000e+00 : f32
    %184 = vector.broadcast %cst_74 : f32 to vector<8x8xf32>
    %185 = arith.select %23, %183, %184 : vector<8x8xi1>, vector<8x8xf32>
    %186 = vector.shape_cast %185 : vector<8x8xf32> to vector<1x8x8xf32>
    %cst_75 = arith.constant dense<0.000000e+00> : vector<1xf32>
    %187 = vector.multi_reduction <add>, %186, %cst_75 [1, 2] : vector<1x8x8xf32> to vector<1xf32>
    %188 = vector.shape_cast %187 : vector<1xf32> to vector<1x1x1xf32>
    %189 = vector.extract %188[0, 0, 0] : f32 from vector<1x1x1xf32>
    %190 = arith.mulf %162, %162 : vector<8x8xf32>
    %cst_76 = arith.constant 0.000000e+00 : f32
    %191 = vector.broadcast %cst_76 : f32 to vector<8x8xf32>
    %192 = arith.select %23, %190, %191 : vector<8x8xi1>, vector<8x8xf32>
    %193 = vector.shape_cast %192 : vector<8x8xf32> to vector<1x8x8xf32>
    %cst_77 = arith.constant dense<0.000000e+00> : vector<1xf32>
    %194 = vector.multi_reduction <add>, %193, %cst_77 [1, 2] : vector<1x8x8xf32> to vector<1xf32>
    %195 = vector.shape_cast %194 : vector<1xf32> to vector<1x1x1xf32>
    %196 = vector.extract %195[0, 0, 0] : f32 from vector<1x1x1xf32>
    %197 = arith.addf %189, %196 : f32
    %cst_78 = arith.constant 4.000000e+00 : f32
    %198 = arith.divf %197, %cst_78 : f32
    %199 = arith.addf %114, %198 : f32
    %c0_79 = arith.constant 0 : index
    %c2 = arith.constant 2 : index
    %c0_80 = arith.constant 0 : index
    %200 = vector.load %arg0[%c0_79, %c2, %c0_80] : memref<2x3x32xf32, #tpu.memory_space<vmem>>, vector<2x1x32xf32>
    %201 = vector.shape_cast %200 : vector<2x1x32xf32> to vector<2x32xf32>
    %c2_81 = arith.constant 2 : index
    %c0_82 = arith.constant 0 : index
    %c0_83 = arith.constant 0 : index
    %202 = vector.load %arg1[%c2_81, %c0_82, %c0_83] : memref<3x8x32xf32, #tpu.memory_space<vmem>>, vector<1x8x32xf32>
    %203 = vector.shape_cast %202 : vector<1x8x32xf32> to vector<8x32xf32>
    %c2_84 = arith.constant 2 : index
    %c0_85 = arith.constant 0 : index
    %c0_86 = arith.constant 0 : index
    %204 = vector.load %arg2[%c2_84, %c0_85, %c0_86] : memref<3x8x32xf32, #tpu.memory_space<vmem>>, vector<1x8x32xf32>
    %205 = vector.shape_cast %204 : vector<1x8x32xf32> to vector<8x32xf32>
    %206 = arith.mulf %203, %203 : vector<8x32xf32>
    %cst_87 = arith.constant dense<0.000000e+00> : vector<8xf32>
    %207 = vector.multi_reduction <add>, %206, %cst_87 [1] : vector<8x32xf32> to vector<8xf32>
    %208 = vector.shape_cast %207 : vector<8xf32> to vector<8x1xf32>
    %209 = math.sqrt %208 : vector<8x1xf32>
    %cst_88 = arith.constant 9.99999996E-13 : f32
    %210 = vector.broadcast %cst_88 : f32 to vector<8x1xf32>
    %211 = arith.maximumf %209, %210 : vector<8x1xf32>
    %212 = vector.broadcast %211 : vector<8x1xf32> to vector<8x32xf32>
    %213 = arith.divf %203, %212 : vector<8x32xf32>
    %214 = arith.mulf %205, %205 : vector<8x32xf32>
    %cst_89 = arith.constant dense<0.000000e+00> : vector<8xf32>
    %215 = vector.multi_reduction <add>, %214, %cst_89 [1] : vector<8x32xf32> to vector<8xf32>
    %216 = vector.shape_cast %215 : vector<8xf32> to vector<8x1xf32>
    %217 = math.sqrt %216 : vector<8x1xf32>
    %cst_90 = arith.constant 9.99999996E-13 : f32
    %218 = vector.broadcast %cst_90 : f32 to vector<8x1xf32>
    %219 = arith.maximumf %217, %218 : vector<8x1xf32>
    %220 = vector.broadcast %219 : vector<8x1xf32> to vector<8x32xf32>
    %221 = arith.divf %205, %220 : vector<8x32xf32>
    %222 = arith.mulf %205, %213 : vector<8x32xf32>
    %223 = arith.mulf %205, %205 : vector<8x32xf32>
    %cst_91 = arith.constant 0.000000e+00 : f32
    %224 = vector.broadcast %cst_91 : f32 to vector<120x32xf32>
    %225 = tpu.concatenate %222, %224 in 0 : vector<8x32xf32>, vector<120x32xf32> -> vector<128x32xf32>
    %226 = tpu.concatenate %223, %224 in 0 : vector<8x32xf32>, vector<120x32xf32> -> vector<128x32xf32>
    %cst_92 = arith.constant dense<0.000000e+00> : vector<2x128xf32>
    %227 = tpu.matmul %201, %225, %cst_92 {dimension_numbers = #tpu.dot_dimension_numbers<[1], [1], [0], [0], [0, 0, 1, 0], [], []>} : vector<2x32xf32>, vector<128x32xf32>, vector<2x128xf32> -> vector<2x128xf32>
    %228 = arith.mulf %201, %201 : vector<2x32xf32>
    %cst_93 = arith.constant dense<0.000000e+00> : vector<2x128xf32>
    %229 = tpu.matmul %228, %226, %cst_93 {dimension_numbers = #tpu.dot_dimension_numbers<[1], [1], [0], [0], [0, 0, 1, 0], [], []>} : vector<2x32xf32>, vector<128x32xf32>, vector<2x128xf32> -> vector<2x128xf32>
    %230 = math.sqrt %229 : vector<2x128xf32>
    %cst_94 = arith.constant 9.99999996E-13 : f32
    %231 = vector.broadcast %cst_94 : f32 to vector<2x128xf32>
    %232 = arith.maximumf %230, %231 : vector<2x128xf32>
    %233 = arith.divf %227, %232 : vector<2x128xf32>
    %c2_95 = arith.constant 2 : index
    %c0_96 = arith.constant 0 : index
    %c0_97 = arith.constant 0 : index
    %234 = vector.load %arg3[%c2_95, %c0_96, %c0_97] : memref<3x2x128xf32, #tpu.memory_space<vmem>>, vector<1x2x128xf32>
    %235 = vector.shape_cast %234 : vector<1x2x128xf32> to vector<2x128xf32>
    %236 = vector.shape_cast %233 : vector<2x128xf32> to vector<1x2x128xf32>
    tpu.vector_store %arg3[%c2_95, %c0_96, %c0_97], %236 {strides = array<i32>} : memref<3x2x128xf32, #tpu.memory_space<vmem>>, vector<1x2x128xf32>,
    %cst_98 = arith.constant 1.000000e+00 : f32
    %237 = vector.broadcast %cst_98 : f32 to vector<2x128xf32>
    %238 = arith.subf %237, %233 : vector<2x128xf32>
    %cst_99 = arith.constant 0.000000e+00 : f32
    %239 = vector.broadcast %cst_99 : f32 to vector<2x128xf32>
    %240 = arith.select %29, %238, %239 : vector<2x128xi1>, vector<2x128xf32>
    %241 = vector.shape_cast %240 : vector<2x128xf32> to vector<1x2x128xf32>
    %cst_100 = arith.constant dense<0.000000e+00> : vector<1xf32>
    %242 = vector.multi_reduction <add>, %241, %cst_100 [1, 2] : vector<1x2x128xf32> to vector<1xf32>
    %243 = vector.shape_cast %242 : vector<1xf32> to vector<1x1x1xf32>
    %244 = vector.extract %243[0, 0, 0] : f32 from vector<1x1x1xf32>
    %245 = arith.addf %160, %244 : f32
    %cst_101 = arith.constant dense<0.000000e+00> : vector<8x8xf32>
    %246 = tpu.matmul %213, %213, %cst_101 {dimension_numbers = #tpu.dot_dimension_numbers<[1], [1], [0], [0], [0, 0, 1, 0], [], []>} : vector<8x32xf32>, vector<8x32xf32>, vector<8x8xf32> -> vector<8x8xf32>
    %cst_102 = arith.constant dense<0.000000e+00> : vector<8x8xf32>
    %247 = tpu.matmul %221, %221, %cst_102 {dimension_numbers = #tpu.dot_dimension_numbers<[1], [1], [0], [0], [0, 0, 1, 0], [], []>} : vector<8x32xf32>, vector<8x32xf32>, vector<8x8xf32> -> vector<8x8xf32>
    %248 = arith.subf %246, %4 : vector<8x8xf32>
    %249 = arith.subf %247, %4 : vector<8x8xf32>
    %250 = arith.mulf %248, %248 : vector<8x8xf32>
    %cst_103 = arith.constant 0.000000e+00 : f32
    %251 = vector.broadcast %cst_103 : f32 to vector<8x8xf32>
    %252 = arith.select %15, %250, %251 : vector<8x8xi1>, vector<8x8xf32>
    %253 = vector.shape_cast %252 : vector<8x8xf32> to vector<1x8x8xf32>
    %cst_104 = arith.constant dense<0.000000e+00> : vector<1xf32>
    %254 = vector.multi_reduction <add>, %253, %cst_104 [1, 2] : vector<1x8x8xf32> to vector<1xf32>
    %255 = vector.shape_cast %254 : vector<1xf32> to vector<1x1x1xf32>
    %256 = vector.extract %255[0, 0, 0] : f32 from vector<1x1x1xf32>
    %257 = arith.mulf %249, %249 : vector<8x8xf32>
    %cst_105 = arith.constant 0.000000e+00 : f32
    %258 = vector.broadcast %cst_105 : f32 to vector<8x8xf32>
    %259 = arith.select %15, %257, %258 : vector<8x8xi1>, vector<8x8xf32>
    %260 = vector.shape_cast %259 : vector<8x8xf32> to vector<1x8x8xf32>
    %cst_106 = arith.constant dense<0.000000e+00> : vector<1xf32>
    %261 = vector.multi_reduction <add>, %260, %cst_106 [1, 2] : vector<1x8x8xf32> to vector<1xf32>
    %262 = vector.shape_cast %261 : vector<1xf32> to vector<1x1x1xf32>
    %263 = vector.extract %262[0, 0, 0] : f32 from vector<1x1x1xf32>
    %264 = arith.addf %256, %263 : f32
    %cst_107 = arith.constant 4.000000e+00 : f32
    %265 = arith.divf %264, %cst_107 : f32
    %cst_108 = arith.constant 9.99999997E-7 : f32
    %266 = arith.mulf %265, %cst_108 : f32
    %267 = arith.addf %182, %266 : f32
    %268 = arith.mulf %246, %246 : vector<8x8xf32>
    %cst_109 = arith.constant 0.000000e+00 : f32
    %269 = vector.broadcast %cst_109 : f32 to vector<8x8xf32>
    %270 = arith.select %23, %268, %269 : vector<8x8xi1>, vector<8x8xf32>
    %271 = vector.shape_cast %270 : vector<8x8xf32> to vector<1x8x8xf32>
    %cst_110 = arith.constant dense<0.000000e+00> : vector<1xf32>
    %272 = vector.multi_reduction <add>, %271, %cst_110 [1, 2] : vector<1x8x8xf32> to vector<1xf32>
    %273 = vector.shape_cast %272 : vector<1xf32> to vector<1x1x1xf32>
    %274 = vector.extract %273[0, 0, 0] : f32 from vector<1x1x1xf32>
    %275 = arith.mulf %247, %247 : vector<8x8xf32>
    %cst_111 = arith.constant 0.000000e+00 : f32
    %276 = vector.broadcast %cst_111 : f32 to vector<8x8xf32>
    %277 = arith.select %23, %275, %276 : vector<8x8xi1>, vector<8x8xf32>
    %278 = vector.shape_cast %277 : vector<8x8xf32> to vector<1x8x8xf32>
    %cst_112 = arith.constant dense<0.000000e+00> : vector<1xf32>
    %279 = vector.multi_reduction <add>, %278, %cst_112 [1, 2] : vector<1x8x8xf32> to vector<1xf32>
    %280 = vector.shape_cast %279 : vector<1xf32> to vector<1x1x1xf32>
    %281 = vector.extract %280[0, 0, 0] : f32 from vector<1x1x1xf32>
    %282 = arith.addf %274, %281 : f32
    %cst_113 = arith.constant 4.000000e+00 : f32
    %283 = arith.divf %282, %cst_113 : f32
    %284 = arith.addf %199, %283 : f32
    %c0_114 = arith.constant 0 : index
    %285 = memref.load %arg4[%c0_114] : memref<3xf32, #tpu.memory_space<smem>>
    memref.store %245, %arg4[%c0_114] : memref<3xf32, #tpu.memory_space<smem>>
    %c1_115 = arith.constant 1 : index
    %286 = memref.load %arg4[%c1_115] : memref<3xf32, #tpu.memory_space<smem>>
    memref.store %267, %arg4[%c1_115] : memref<3xf32, #tpu.memory_space<smem>>
    %c2_116 = arith.constant 2 : index
    %287 = memref.load %arg4[%c2_116] : memref<3xf32, #tpu.memory_space<smem>>
    memref.store %284, %arg4[%c2_116] : memref<3xf32, #tpu.memory_space<smem>>
    return
  }
}

</mosaic_0001>

<llo_original>
// kernel: tpu_custom_call.1
$region0: #{tpu_custom_call.1}
  #allocation0 [shape = 'u32[]', space=smem, size = 0x4, offset = 0x4, fixed_abs, tag = 'smem constant byte address 0x4 - core index']
  #allocation1 [shape = 'u32[144,128]{1,0:T(1,128)}', space=vmem, size = 0x12000, scoped, tag = 'internal scratch']
  %s0 = inlined_call_operand.vmem [shape: f32[2,3,32], index: 0, kind: input, shape index: {}]
  %s1 = inlined_call_operand.hbm [shape: f32[3,8,32], index: 1, kind: input, shape index: {}]
  %s2 = inlined_call_operand.hbm [shape: f32[3,8,32], index: 2, kind: input, shape index: {}]
  %s3 = inlined_call_operand.hbm [shape: f32[3,2,128], index: 3, kind: output, shape index: {0}]
  %s4 = inlined_call_operand.hbm [shape: f32[3], index: 4, kind: output, shape index: {1}]
  %5 = xla_tuple %s3, %s4
  %s6 = sld [smem:[#allocation0]]
  $region38: #{tpu_custom_call.1} parent=0
    _
  %s8 = ssub.s32 1, %s6
  %s9 = scalar_select 0, %s8, %s6
  $region1: #{tpu_custom_call.1} parent=0
    #allocation2 [shape = 'u8[12288]{0}', space=vmem, size = 0x3000, scoped, tag = 'input window, operand 1, single buffered']
    #allocation3 [shape = 's32[1]{0}', space=sflag, size = 0x4, scoped, tag = 'scoped memory for tpu_custom_call.1']
    #allocation4 [shape = 's32[1]{0}', space=sflag, size = 0x4, scoped, tag = 'scoped memory for tpu_custom_call.1']
    #allocation5 [shape = 's32[1]{0}', space=sflag, size = 0x4, scoped, tag = 'scoped memory for tpu_custom_call.1']
    #allocation6 [shape = 'u8[12288]{0}', space=vmem, size = 0x3000, scoped, tag = 'input window, operand 2, single buffered']
    #allocation7 [shape = 's32[1]{0}', space=sflag, size = 0x4, scoped, tag = 'scoped memory for tpu_custom_call.1']
    #allocation8 [shape = 'u8[3072]{0}', space=vmem, size = 0xc00, scoped, tag = 'output window, operand 0, single buffered']
    #allocation9 [shape = 'u8[512]{0}', space=smem, size = 0x200, scoped, tag = 'output window, operand 1, single buffered']
    %10 = vsyncpa [#allocation3], 0
    %11 = vsyncpa [#allocation7], 0
    %12 = vsyncpa [#allocation4], 0
    %13 = vsyncpa [#allocation5], 0
    // Predicated region
    $region2: #{tpu_custom_call.1} parent=1 // pred_check
      _
    $region3: #{tpu_custom_call.1} parent=1 // pred_check_branch
      %15 = sbr.rel (0) target = $region5
    $region4: #{tpu_custom_call.1} parent=1 // pred_region
      _
    $region5: #{tpu_custom_call.1} parent=1 // pred_fallthru
      _
    // Predicated region
    $region6: #{tpu_custom_call.1} parent=1 // pred_check
      _
    $region7: #{tpu_custom_call.1} parent=1 // pred_check_branch
      %17 = sbr.rel (0) target = $region9
    $region8: #{tpu_custom_call.1} parent=1 // pred_region
      %s19 = ssub.s32 384, 384
      %20 = vsyncadd [#allocation3], %s19
      %s21 = sshll.u32 [#allocation2], 4
      %s22 = int_to_ptr.vmem [resolvable:$true] %s21
      %27 = dma.hbm_to_vmem [thread:$0]  %s1, 384, %s22, [#allocation3], 128, 128, 8
    $region9: #{tpu_custom_call.1} parent=1 // pred_fallthru
      _
    // Predicated region
    $region10: #{tpu_custom_call.1} parent=1 // pred_check
      _
    $region11: #{tpu_custom_call.1} parent=1 // pred_check_branch
      %29 = sbr.rel (0) target = $region13
    $region12: #{tpu_custom_call.1} parent=1 // pred_region
      %s31 = ssub.s32 384, 384
      %32 = vsyncadd [#allocation7], %s31
      %s33 = sshll.u32 [#allocation6], 4
      %s34 = int_to_ptr.vmem [resolvable:$true] %s33
      %39 = dma.hbm_to_vmem [thread:$0]  %s2, 384, %s34, [#allocation7], 128, 128, 8
    $region13: #{tpu_custom_call.1} parent=1 // pred_fallthru
      _
    // Predicated region
    $region14: #{tpu_custom_call.1} parent=1 // pred_check
      _
    $region15: #{tpu_custom_call.1} parent=1 // pred_check_branch
      %41 = sbr.rel (0) target = $region17
    $region16: #{tpu_custom_call.1} parent=1 // pred_region
      %42 = dma.done [#allocation3], 384
    $region17: #{tpu_custom_call.1} parent=1 // pred_fallthru
      _
    // Predicated region
    $region18: #{tpu_custom_call.1} parent=1 // pred_check
      _
    $region19: #{tpu_custom_call.1} parent=1 // pred_check_branch
      %44 = sbr.rel (0) target = $region21
    $region20: #{tpu_custom_call.1} parent=1 // pred_region
      %45 = dma.done [#allocation7], 384
    $region21: #{tpu_custom_call.1} parent=1 // pred_fallthru
      _
    %v46 = vlaneseq
    %v47 = vshrl.u32 %v46, 7
    %v48 = vlaneseq
    %v49 = vand.u32 %v48, 127
    %vm50 = vcmp.eq.s32.totalorder %v47, %v49
    %v51 = vsel %vm50, 1, 0
    %v52 = vcvt.s32.f32 %v51
    %vm53 = vcmp.ge.s32.totalorder %v47, 2
    %vm54 = vcmp.lt.s32.totalorder %v47, 4
    %vm55 = vmand %vm53, %vm54
    %vm56 = vcmp.ge.s32.totalorder %v49, 2
    %vm57 = vmand %vm55, %vm56
    %vm58 = vcmp.lt.s32.totalorder %v49, 4
    %vm59 = vmand %vm57, %vm58
    %vm60 = vcmp.lt.s32.totalorder %v47, 2
    %vm61 = vmand %vm60, %vm56
    %vm62 = vmand %vm61, %vm58
    %vm63 = vmand %vm56, %vm58
    %v64 = vld [vmem:[%s0] sm:$0x1]
    %v65 = vld [vmem:[%s0 + $0x4] sm:$0x1]
    %v66 = vld [vmem:[#allocation2] sm:$0xff]
    %v67 = vld [vmem:[#allocation6] sm:$0xff]
    %v68 = vmul.f32 %v66, %v66
    %vm69 = vcmask 261120
    %v70 = vsel %vm69, %v68, 0.0
    %71 = vadd.xlane.f32.xlu0 %v70
    %v72 = vpop.xlane.xlu0 %71
    %v73 = vrsqrt.pop %v72
    %v74 = vmul.f32 %v72, %v73
    %vm75 = vcmp.eq.f32.partialorder %v72, inf
    %v76 = vsel %vm75, %v72, %v74
    %vm77 = vcmp.eq.f32.partialorder %v72, 0.0
    %v78 = vand.u32 %v72, 2147483648
    %v79 = vsel %vm77, %v78, %v76
    %v80 = vmax.f32 %v79, 1e-12
    %v81 = vrcp.pop %v80
    %v82 = vmul.f32 %v66, %v81
    %v83 = vmul.f32 %v67, %v67
    %v84 = vsel %vm69, %v83, 0.0
    %85 = vadd.xlane.f32.xlu0 %v84
    %v86 = vpop.xlane.xlu0 %85
    %v87 = vrsqrt.pop %v86
    %v88 = vmul.f32 %v86, %v87
    %vm89 = vcmp.eq.f32.partialorder %v86, inf
    %v90 = vsel %vm89, %v86, %v88
    %vm91 = vcmp.eq.f32.partialorder %v86, 0.0
    %v92 = vand.u32 %v86, 2147483648
    %v93 = vsel %vm91, %v92, %v90
    %v94 = vmax.f32 %v93, 1e-12
    %v95 = vrcp.pop %v94
    %v96 = vmul.f32 %v67, %v95
    %v97 = vmul.f32 %v67, %v82
    %v100 = vrot.slane %v65, 7
    %vm101 = vcmask 1041409
    %v102 = vsel %vm101, %v100, %v64
    %v103 = vsel %vm69, %v102, 0
    %v106 = vsel %vm69, %v97, 0
    %v109 = vsel %vm69, 0.0, 0
    %111 = vmatprep.subr.mxu0 0.0
    %112 = vmatpush1.xpose.msra.mxu0 %v106
    %113 = vmatprep.subr.mxu0 0.0
    %114 = vmatpush1.xpose.msra.mxu0 %v109
    %115 = vmatprep.subr.mxu0 0.0
    %116 = vmatpush1.xpose.msra.mxu0 %v109
    %117 = vmatprep.subr.mxu0 0.0
    %118 = vmatpush1.xpose.msra.mxu0 %v109
    %119 = vmatprep.subr.mxu0 0.0
    %120 = vmatpush1.xpose.msra.mxu0 %v109
    %121 = vmatprep.subr.mxu0 0.0
    %122 = vmatpush1.xpose.msra.mxu0 %v109
    %123 = vmatprep.subr.mxu0 0.0
    %124 = vmatpush1.xpose.msra.mxu0 %v109
    %125 = vmatprep.subr.mxu0 0.0
    %126 = vmatpush1.xpose.msra.mxu0 %v109
    %127 = vmatprep.subr.mxu0 0.0
    %128 = vmatpush1.xpose.msra.mxu0 %v109
    %129 = vmatprep.subr.mxu0 0.0
    %130 = vmatpush1.xpose.msra.mxu0 %v109
    %131 = vmatprep.subr.mxu0 0.0
    %132 = vmatpush1.xpose.msra.mxu0 %v109
    %133 = vmatprep.subr.mxu0 0.0
    %134 = vmatpush1.xpose.msra.mxu0 %v109
    %135 = vmatprep.subr.mxu0 0.0
    %136 = vmatpush1.xpose.msra.mxu0 %v109
    %137 = vmatprep.subr.mxu0 0.0
    %138 = vmatpush1.xpose.msra.mxu0 %v109
    %139 = vmatprep.subr.mxu0 0.0
    %140 = vmatpush1.xpose.msra.mxu0 %v109
    %141 = vmatprep.subr.mxu0 0.0
    %142 = vmatpush1.xpose.msra.mxu0 %v109
    %143 = vmatprep.subr.mxu0 0.0
    %144 = vmatpush1.xpose.msra.mxu0 0.0
    %145 = vmatprep.subr.mxu0 0.0
    %146 = vmatpush1.xpose.msra.mxu0 0.0
    %147 = vmatprep.subr.mxu0 0.0
    %148 = vmatpush1.xpose.msra.mxu0 0.0
    %149 = vmatprep.subr.mxu0 0.0
    %150 = vmatpush1.xpose.msra.mxu0 0.0
    %151 = vmatprep.subr.mxu0 0.0
    %152 = vmatpush1.xpose.msra.mxu0 0.0
    %153 = vmatprep.subr.mxu0 0.0
    %154 = vmatpush1.xpose.msra.mxu0 0.0
    %155 = vmatprep.subr.mxu0 0.0
    %156 = vmatpush1.xpose.msra.mxu0 0.0
    %157 = vmatprep.subr.mxu0 0.0
    %158 = vmatpush1.xpose.msra.mxu0 0.0
    %159 = vmatprep.subr.mxu0 0.0
    %160 = vmatpush1.xpose.msra.mxu0 0.0
    %161 = vmatprep.subr.mxu0 0.0
    %162 = vmatpush1.xpose.msra.mxu0 0.0
    %163 = vmatprep.subr.mxu0 0.0
    %164 = vmatpush1.xpose.msra.mxu0 0.0
    %165 = vmatprep.subr.mxu0 0.0
    %166 = vmatpush1.xpose.msra.mxu0 0.0
    %167 = vmatprep.subr.mxu0 0.0
    %168 = vmatpush1.xpose.msra.mxu0 0.0
    %169 = vmatprep.subr.mxu0 0.0
    %170 = vmatpush1.xpose.msra.mxu0 0.0
    %171 = vmatprep.subr.mxu0 0.0
    %172 = vmatpush1.xpose.msra.mxu0 0.0
    %173 = vmatprep.subr.mxu0 0.0
    %174 = vmatpush1.xpose.msra.mxu0 0.0
    %175 = vmatprep.mubr.f32.mxu0 0.0
    %176 = vmatmul.mubr.f32.gmra.mrb[0].mxu0 %v103
    %v177 = vpop.f32.mrb[0].mxu0
    %v178 = vadd.f32 0.0, %v177
    %v179 = vpop.f32.mrb[0].mxu0
    %180 = vdwg.mxu0
    %v181 = vmul.f32 %v64, %v64
    %v182 = vmul.f32 %v65, %v65
    %v185 = vrot.slane %v182, 7
    %v186 = vsel %vm101, %v185, %v181
    %v187 = vsel %vm69, %v186, 0
    %v190 = vsel %vm69, %v83, 0
    %192 = vmatprep.subr.mxu0 0.0
    %193 = vmatpush1.xpose.msra.mxu0 %v190
    %194 = vmatprep.subr.mxu0 0.0
    %195 = vmatpush1.xpose.msra.mxu0 %v109
    %196 = vmatprep.subr.mxu0 0.0
    %197 = vmatpush1.xpose.msra.mxu0 %v109
    %198 = vmatprep.subr.mxu0 0.0
    %199 = vmatpush1.xpose.msra.mxu0 %v109
    %200 = vmatprep.subr.mxu0 0.0
    %201 = vmatpush1.xpose.msra.mxu0 %v109
    %202 = vmatprep.subr.mxu0 0.0
    %203 = vmatpush1.xpose.msra.mxu0 %v109
    %204 = vmatprep.subr.mxu0 0.0
    %205 = vmatpush1.xpose.msra.mxu0 %v109
    %206 = vmatprep.subr.mxu0 0.0
    %207 = vmatpush1.xpose.msra.mxu0 %v109
    %208 = vmatprep.subr.mxu0 0.0
    %209 = vmatpush1.xpose.msra.mxu0 %v109
    %210 = vmatprep.subr.mxu0 0.0
    %211 = vmatpush1.xpose.msra.mxu0 %v109
    %212 = vmatprep.subr.mxu0 0.0
    %213 = vmatpush1.xpose.msra.mxu0 %v109
    %214 = vmatprep.subr.mxu0 0.0
    %215 = vmatpush1.xpose.msra.mxu0 %v109
    %216 = vmatprep.subr.mxu0 0.0
    %217 = vmatpush1.xpose.msra.mxu0 %v109
    %218 = vmatprep.subr.mxu0 0.0
    %219 = vmatpush1.xpose.msra.mxu0 %v109
    %220 = vmatprep.subr.mxu0 0.0
    %221 = vmatpush1.xpose.msra.mxu0 %v109
    %222 = vmatprep.subr.mxu0 0.0
    %223 = vmatpush1.xpose.msra.mxu0 %v109
    %224 = vmatprep.subr.mxu0 0.0
    %225 = vmatpush1.xpose.msra.mxu0 0.0
    %226 = vmatprep.subr.mxu0 0.0
    %227 = vmatpush1.xpose.msra.mxu0 0.0
    %228 = vmatprep.subr.mxu0 0.0
    %229 = vmatpush1.xpose.msra.mxu0 0.0
    %230 = vmatprep.subr.mxu0 0.0
    %231 = vmatpush1.xpose.msra.mxu0 0.0
    %232 = vmatprep.subr.mxu0 0.0
    %233 = vmatpush1.xpose.msra.mxu0 0.0
    %234 = vmatprep.subr.mxu0 0.0
    %235 = vmatpush1.xpose.msra.mxu0 0.0
    %236 = vmatprep.subr.mxu0 0.0
    %237 = vmatpush1.xpose.msra.mxu0 0.0
    %238 = vmatprep.subr.mxu0 0.0
    %239 = vmatpush1.xpose.msra.mxu0 0.0
    %240 = vmatprep.subr.mxu0 0.0
    %241 = vmatpush1.xpose.msra.mxu0 0.0
    %242 = vmatprep.subr.mxu0 0.0
    %243 = vmatpush1.xpose.msra.mxu0 0.0
    %244 = vmatprep.subr.mxu0 0.0
    %245 = vmatpush1.xpose.msra.mxu0 0.0
    %246 = vmatprep.subr.mxu0 0.0
    %247 = vmatpush1.xpose.msra.mxu0 0.0
    %248 = vmatprep.subr.mxu0 0.0
    %249 = vmatpush1.xpose.msra.mxu0 0.0
    %250 = vmatprep.subr.mxu0 0.0
    %251 = vmatpush1.xpose.msra.mxu0 0.0
    %252 = vmatprep.subr.mxu0 0.0
    %253 = vmatpush1.xpose.msra.mxu0 0.0
    %254 = vmatprep.subr.mxu0 0.0
    %255 = vmatpush1.xpose.msra.mxu0 0.0
    %256 = vmatprep.mubr.f32.mxu0 0.0
    %257 = vmatmul.mubr.f32.gmra.mrb[0].mxu0 %v187
    %v258 = vpop.f32.mrb[0].mxu0
    %v259 = vadd.f32 0.0, %v258
    %v260 = vpop.f32.mrb[0].mxu0
    %261 = vdwg.mxu0
    %v262 = vrsqrt.pop %v259
    %v263 = vmul.f32 %v259, %v262
    %vm264 = vcmp.eq.f32.partialorder %v259, inf
    %v265 = vsel %vm264, %v259, %v263
    %vm266 = vcmp.eq.f32.partialorder %v259, 0.0
    %v267 = vand.u32 %v259, 2147483648
    %v268 = vsel %vm266, %v267, %v265
    %v269 = vmax.f32 %v268, 1e-12
    %v270 = vrcp.pop %v269
    %v271 = vmul.f32 %v178, %v270
    %272 = vst [vmem:[#allocation8] sm:$0x3] %v271
    %v273 = vsub.f32 1.0, %v271
    %v274 = vsel %vm63, %v273, 0.0
    %vm275 = vcmask 1041408
    %v276 = vsel %vm275, %v274, 0.0
    %277 = vadd.xlane.f32.xlu0 %v276
    %v278 = vpop.xlane.xlu0 %277
    %v279 = vrot.slane %v278, 4
    %v280 = vadd.f32 %v278, %v279
    %v281 = vrot.slane %v280, 2
    %v282 = vadd.f32 %v280, %v281
    %v283 = vrot.slane %v282, 1
    %v284 = vadd.f32 %v282, %v283
    %s285 = vtos %v284
    %s286 = sadd.f32 %s285, 0.0
    %v288 = vsel %vm69, %v82, 0
    %290 = vmatprep.subr.mxu0 0.0
    %291 = vmatpush1.xpose.msra.mxu0 %v288
    %292 = vmatprep.subr.mxu0 0.0
    %293 = vmatpush1.xpose.msra.mxu0 0.0
    %294 = vmatprep.subr.mxu0 0.0
    %295 = vmatpush1.xpose.msra.mxu0 0.0
    %296 = vmatprep.subr.mxu0 0.0
    %297 = vmatpush1.xpose.msra.mxu0 0.0
    %298 = vmatprep.subr.mxu0 0.0
    %299 = vmatpush1.xpose.msra.mxu0 0.0
    %300 = vmatprep.subr.mxu0 0.0
    %301 = vmatpush1.xpose.msra.mxu0 0.0
    %302 = vmatprep.subr.mxu0 0.0
    %303 = vmatpush1.xpose.msra.mxu0 0.0
    %304 = vmatprep.subr.mxu0 0.0
    %305 = vmatpush1.xpose.msra.mxu0 0.0
    %306 = vmatprep.subr.mxu0 0.0
    %307 = vmatpush1.xpose.msra.mxu0 0.0
    %308 = vmatprep.subr.mxu0 0.0
    %309 = vmatpush1.xpose.msra.mxu0 0.0
    %310 = vmatprep.subr.mxu0 0.0
    %311 = vmatpush1.xpose.msra.mxu0 0.0
    %312 = vmatprep.subr.mxu0 0.0
    %313 = vmatpush1.xpose.msra.mxu0 0.0
    %314 = vmatprep.subr.mxu0 0.0
    %315 = vmatpush1.xpose.msra.mxu0 0.0
    %316 = vmatprep.subr.mxu0 0.0
    %317 = vmatpush1.xpose.msra.mxu0 0.0
    %318 = vmatprep.subr.mxu0 0.0
    %319 = vmatpush1.xpose.msra.mxu0 0.0
    %320 = vmatprep.subr.mxu0 0.0
    %321 = vmatpush1.xpose.msra.mxu0 0.0
    %322 = vmatprep.subr.mxu0 0.0
    %323 = vmatpush1.xpose.msra.mxu0 0.0
    %324 = vmatprep.subr.mxu0 0.0
    %325 = vmatpush1.xpose.msra.mxu0 0.0
    %326 = vmatprep.subr.mxu0 0.0
    %327 = vmatpush1.xpose.msra.mxu0 0.0
    %328 = vmatprep.subr.mxu0 0.0
    %329 = vmatpush1.xpose.msra.mxu0 0.0
    %330 = vmatprep.subr.mxu0 0.0
    %331 = vmatpush1.xpose.msra.mxu0 0.0
    %332 = vmatprep.subr.mxu0 0.0
    %333 = vmatpush1.xpose.msra.mxu0 0.0
    %334 = vmatprep.subr.mxu0 0.0
    %335 = vmatpush1.xpose.msra.mxu0 0.0
    %336 = vmatprep.subr.mxu0 0.0
    %337 = vmatpush1.xpose.msra.mxu0 0.0
    %338 = vmatprep.subr.mxu0 0.0
    %339 = vmatpush1.xpose.msra.mxu0 0.0
    %340 = vmatprep.subr.mxu0 0.0
    %341 = vmatpush1.xpose.msra.mxu0 0.0
    %342 = vmatprep.subr.mxu0 0.0
    %343 = vmatpush1.xpose.msra.mxu0 0.0
    %344 = vmatprep.subr.mxu0 0.0
    %345 = vmatpush1.xpose.msra.mxu0 0.0
    %346 = vmatprep.subr.mxu0 0.0
    %347 = vmatpush1.xpose.msra.mxu0 0.0
    %348 = vmatprep.subr.mxu0 0.0
    %349 = vmatpush1.xpose.msra.mxu0 0.0
    %350 = vmatprep.subr.mxu0 0.0
    %351 = vmatpush1.xpose.msra.mxu0 0.0
    %352 = vmatprep.subr.mxu0 0.0
    %353 = vmatpush1.xpose.msra.mxu0 0.0
    %354 = vmatprep.mubr.f32.mxu0 0.0
    %355 = vmatmul.mubr.f32.gmra.mrb[0].mxu0 %v288
    %v356 = vpop.f32.mrb[0].mxu0
    %v357 = vadd.f32 0.0, %v356
    %v358 = vpop.f32.mrb[0].mxu0
    %359 = vdwg.mxu0
    %v361 = vsel %vm69, %v96, 0
    %363 = vmatprep.subr.mxu0 0.0
    %364 = vmatpush1.xpose.msra.mxu0 %v361
    %365 = vmatprep.subr.mxu0 0.0
    %366 = vmatpush1.xpose.msra.mxu0 0.0
    %367 = vmatprep.subr.mxu0 0.0
    %368 = vmatpush1.xpose.msra.mxu0 0.0
    %369 = vmatprep.subr.mxu0 0.0
    %370 = vmatpush1.xpose.msra.mxu0 0.0
    %371 = vmatprep.subr.mxu0 0.0
    %372 = vmatpush1.xpose.msra.mxu0 0.0
    %373 = vmatprep.subr.mxu0 0.0
    %374 = vmatpush1.xpose.msra.mxu0 0.0
    %375 = vmatprep.subr.mxu0 0.0
    %376 = vmatpush1.xpose.msra.mxu0 0.0
    %377 = vmatprep.subr.mxu0 0.0
    %378 = vmatpush1.xpose.msra.mxu0 0.0
    %379 = vmatprep.subr.mxu0 0.0
    %380 = vmatpush1.xpose.msra.mxu0 0.0
    %381 = vmatprep.subr.mxu0 0.0
    %382 = vmatpush1.xpose.msra.mxu0 0.0
    %383 = vmatprep.subr.mxu0 0.0
    %384 = vmatpush1.xpose.msra.mxu0 0.0
    %385 = vmatprep.subr.mxu0 0.0
    %386 = vmatpush1.xpose.msra.mxu0 0.0
    %387 = vmatprep.subr.mxu0 0.0
    %388 = vmatpush1.xpose.msra.mxu0 0.0
    %389 = vmatprep.subr.mxu0 0.0
    %390 = vmatpush1.xpose.msra.mxu0 0.0
    %391 = vmatprep.subr.mxu0 0.0
    %392 = vmatpush1.xpose.msra.mxu0 0.0
    %393 = vmatprep.subr.mxu0 0.0
    %394 = vmatpush1.xpose.msra.mxu0 0.0
    %395 = vmatprep.subr.mxu0 0.0
    %396 = vmatpush1.xpose.msra.mxu0 0.0
    %397 = vmatprep.subr.mxu0 0.0
    %398 = vmatpush1.xpose.msra.mxu0 0.0
    %399 = vmatprep.subr.mxu0 0.0
    %400 = vmatpush1.xpose.msra.mxu0 0.0
    %401 = vmatprep.subr.mxu0 0.0
    %402 = vmatpush1.xpose.msra.mxu0 0.0
    %403 = vmatprep.subr.mxu0 0.0
    %404 = vmatpush1.xpose.msra.mxu0 0.0
    %405 = vmatprep.subr.mxu0 0.0
    %406 = vmatpush1.xpose.msra.mxu0 0.0
    %407 = vmatprep.subr.mxu0 0.0
    %408 = vmatpush1.xpose.msra.mxu0 0.0
    %409 = vmatprep.subr.mxu0 0.0
    %410 = vmatpush1.xpose.msra.mxu0 0.0
    %411 = vmatprep.subr.mxu0 0.0
    %412 = vmatpush1.xpose.msra.mxu0 0.0
    %413 = vmatprep.subr.mxu0 0.0
    %414 = vmatpush1.xpose.msra.mxu0 0.0
    %415 = vmatprep.subr.mxu0 0.0
    %416 = vmatpush1.xpose.msra.mxu0 0.0
    %417 = vmatprep.subr.mxu0 0.0
    %418 = vmatpush1.xpose.msra.mxu0 0.0
    %419 = vmatprep.subr.mxu0 0.0
    %420 = vmatpush1.xpose.msra.mxu0 0.0
    %421 = vmatprep.subr.mxu0 0.0
    %422 = vmatpush1.xpose.msra.mxu0 0.0
    %423 = vmatprep.subr.mxu0 0.0
    %424 = vmatpush1.xpose.msra.mxu0 0.0
    %425 = vmatprep.subr.mxu0 0.0
    %426 = vmatpush1.xpose.msra.mxu0 0.0
    %427 = vmatprep.mubr.f32.mxu0 0.0
    %428 = vmatmul.mubr.f32.gmra.mrb[0].mxu0 %v361
    %v429 = vpop.f32.mrb[0].mxu0
    %v430 = vadd.f32 0.0, %v429
    %v431 = vpop.f32.mrb[0].mxu0
    %432 = vdwg.mxu0
    %v433 = vsub.f32 %v357, %v52
    %v434 = vsub.f32 %v430, %v52
    %v435 = vmul.f32 %v433, %v433
    %v436 = vsel %vm59, %v435, 0.0
    %vm437 = vcmask 64512
    %v438 = vsel %vm437, %v436, 0.0
    %439 = vadd.xlane.f32.xlu0 %v438
    %v440 = vpop.xlane.xlu0 %439
    %v441 = vrot.slane %v440, 4
    %v442 = vadd.f32 %v440, %v441
    %v443 = vrot.slane %v442, 2
    %v444 = vadd.f32 %v442, %v443
    %v445 = vrot.slane %v444, 1
    %v446 = vadd.f32 %v444, %v445
    %s447 = vtos %v446
    %v448 = vmul.f32 %v434, %v434
    %v449 = vsel %vm59, %v448, 0.0
    %v450 = vsel %vm437, %v449, 0.0
    %451 = vadd.xlane.f32.xlu0 %v450
    %v452 = vpop.xlane.xlu0 %451
    %v453 = vrot.slane %v452, 4
    %v454 = vadd.f32 %v452, %v453
    %v455 = vrot.slane %v454, 2
    %v456 = vadd.f32 %v454, %v455
    %v457 = vrot.slane %v456, 1
    %v458 = vadd.f32 %v456, %v457
    %s459 = vtos %v458
    %s460 = sadd.f32 %s447, %s459
    %v461 = vrcp.pop 4.0
    %s462 = vtos %v461
    %s463 = smul.f32 %s460, %s462
    %s464 = smul.f32 %s463, 1e-06
    %s465 = sadd.f32 %s464, 0.0
    %v466 = vmul.f32 %v357, %v357
    %v467 = vsel %vm62, %v466, 0.0
    %v468 = vsel %vm437, %v467, 0.0
    %469 = vadd.xlane.f32.xlu0 %v468
    %v470 = vpop.xlane.xlu0 %469
    %v471 = vrot.slane %v470, 4
    %v472 = vadd.f32 %v470, %v471
    %v473 = vrot.slane %v472, 2
    %v474 = vadd.f32 %v472, %v473
    %v475 = vrot.slane %v474, 1
    %v476 = vadd.f32 %v474, %v475
    %s477 = vtos %v476
    %v478 = vmul.f32 %v430, %v430
    %v479 = vsel %vm62, %v478, 0.0
    %v480 = vsel %vm437, %v479, 0.0
    %481 = vadd.xlane.f32.xlu0 %v480
    %v482 = vpop.xlane.xlu0 %481
    %v483 = vrot.slane %v482, 4
    %v484 = vadd.f32 %v482, %v483
    %v485 = vrot.slane %v484, 2
    %v486 = vadd.f32 %v484, %v485
    %v487 = vrot.slane %v486, 1
    %v488 = vadd.f32 %v486, %v487
    %s489 = vtos %v488
    %s490 = sadd.f32 %s477, %s489
    %v491 = vrcp.pop 4.0
    %s492 = vtos %v491
    %s493 = smul.f32 %s490, %s492
    %s494 = sadd.f32 %s493, 0.0
    %v495 = vld [vmem:[%s0 + $0x1] sm:$0x1]
    %v496 = vld [vmem:[%s0 + $0x5] sm:$0x1]
    %s497 = scalar_lea.vmem [#allocation2], 8
    %v498 = vld [vmem:[%s497] sm:$0xff]
    %s499 = scalar_lea.vmem [#allocation6], 8
    %v500 = vld [vmem:[%s499] sm:$0xff]
    %v501 = vmul.f32 %v498, %v498
    %v502 = vsel %vm69, %v501, 0.0
    %503 = vadd.xlane.f32.xlu0 %v502
    %v504 = vpop.xlane.xlu0 %503
    %v505 = vrsqrt.pop %v504
    %v506 = vmul.f32 %v504, %v505
    %vm507 = vcmp.eq.f32.partialorder %v504, inf
    %v508 = vsel %vm507, %v504, %v506
    %vm509 = vcmp.eq.f32.partialorder %v504, 0.0
    %v510 = vand.u32 %v504, 2147483648
    %v511 = vsel %vm509, %v510, %v508
    %v512 = vmax.f32 %v511, 1e-12
    %v513 = vrcp.pop %v512
    %v514 = vmul.f32 %v498, %v513
    %v515 = vmul.f32 %v500, %v500
    %v516 = vsel %vm69, %v515, 0.0
    %517 = vadd.xlane.f32.xlu0 %v516
    %v518 = vpop.xlane.xlu0 %517
    %v519 = vrsqrt.pop %v518
    %v520 = vmul.f32 %v518, %v519
    %vm521 = vcmp.eq.f32.partialorder %v518, inf
    %v522 = vsel %vm521, %v518, %v520
    %vm523 = vcmp.eq.f32.partialorder %v518, 0.0
    %v524 = vand.u32 %v518, 2147483648
    %v525 = vsel %vm523, %v524, %v522
    %v526 = vmax.f32 %v525, 1e-12
    %v527 = vrcp.pop %v526
    %v528 = vmul.f32 %v500, %v527
    %v529 = vmul.f32 %v500, %v514
    %v532 = vrot.slane %v496, 7
    %v533 = vsel %vm101, %v532, %v495
    %v534 = vsel %vm69, %v533, 0
    %v537 = vsel %vm69, %v529, 0
    %539 = vmatprep.subr.mxu0 0.0
    %540 = vmatpush1.xpose.msra.mxu0 %v537
    %541 = vmatprep.subr.mxu0 0.0
    %542 = vmatpush1.xpose.msra.mxu0 %v109
    %543 = vmatprep.subr.mxu0 0.0
    %544 = vmatpush1.xpose.msra.mxu0 %v109
    %545 = vmatprep.subr.mxu0 0.0
    %546 = vmatpush1.xpose.msra.mxu0 %v109
    %547 = vmatprep.subr.mxu0 0.0
    %548 = vmatpush1.xpose.msra.mxu0 %v109
    %549 = vmatprep.subr.mxu0 0.0
    %550 = vmatpush1.xpose.msra.mxu0 %v109
    %551 = vmatprep.subr.mxu0 0.0
    %552 = vmatpush1.xpose.msra.mxu0 %v109
    %553 = vmatprep.subr.mxu0 0.0
    %554 = vmatpush1.xpose.msra.mxu0 %v109
    %555 = vmatprep.subr.mxu0 0.0
    %556 = vmatpush1.xpose.msra.mxu0 %v109
    %557 = vmatprep.subr.mxu0 0.0
    %558 = vmatpush1.xpose.msra.mxu0 %v109
    %559 = vmatprep.subr.mxu0 0.0
    %560 = vmatpush1.xpose.msra.mxu0 %v109
    %561 = vmatprep.subr.mxu0 0.0
    %562 = vmatpush1.xpose.msra.mxu0 %v109
    %563 = vmatprep.subr.mxu0 0.0
    %564 = vmatpush1.xpose.msra.mxu0 %v109
    %565 = vmatprep.subr.mxu0 0.0
    %566 = vmatpush1.xpose.msra.mxu0 %v109
    %567 = vmatprep.subr.mxu0 0.0
    %568 = vmatpush1.xpose.msra.mxu0 %v109
    %569 = vmatprep.subr.mxu0 0.0
    %570 = vmatpush1.xpose.msra.mxu0 %v109
    %571 = vmatprep.subr.mxu0 0.0
    %572 = vmatpush1.xpose.msra.mxu0 0.0
    %573 = vmatprep.subr.mxu0 0.0
    %574 = vmatpush1.xpose.msra.mxu0 0.0
    %575 = vmatprep.subr.mxu0 0.0
    %576 = vmatpush1.xpose.msra.mxu0 0.0
    %577 = vmatprep.subr.mxu0 0.0
    %578 = vmatpush1.xpose.msra.mxu0 0.0
    %579 = vmatprep.subr.mxu0 0.0
    %580 = vmatpush1.xpose.msra.mxu0 0.0
    %581 = vmatprep.subr.mxu0 0.0
    %582 = vmatpush1.xpose.msra.mxu0 0.0
    %583 = vmatprep.subr.mxu0 0.0
    %584 = vmatpush1.xpose.msra.mxu0 0.0
    %585 = vmatprep.subr.mxu0 0.0
    %586 = vmatpush1.xpose.msra.mxu0 0.0
    %587 = vmatprep.subr.mxu0 0.0
    %588 = vmatpush1.xpose.msra.mxu0 0.0
    %589 = vmatprep.subr.mxu0 0.0
    %590 = vmatpush1.xpose.msra.mxu0 0.0
    %591 = vmatprep.subr.mxu0 0.0
    %592 = vmatpush1.xpose.msra.mxu0 0.0
    %593 = vmatprep.subr.mxu0 0.0
    %594 = vmatpush1.xpose.msra.mxu0 0.0
    %595 = vmatprep.subr.mxu0 0.0
    %596 = vmatpush1.xpose.msra.mxu0 0.0
    %597 = vmatprep.subr.mxu0 0.0
    %598 = vmatpush1.xpose.msra.mxu0 0.0
    %599 = vmatprep.subr.mxu0 0.0
    %600 = vmatpush1.xpose.msra.mxu0 0.0
    %601 = vmatprep.subr.mxu0 0.0
    %602 = vmatpush1.xpose.msra.mxu0 0.0
    %603 = vmatprep.mubr.f32.mxu0 0.0
    %604 = vmatmul.mubr.f32.gmra.mrb[0].mxu0 %v534
    %v605 = vpop.f32.mrb[0].mxu0
    %v606 = vadd.f32 0.0, %v605
    %v607 = vpop.f32.mrb[0].mxu0
    %608 = vdwg.mxu0
    %v609 = vmul.f32 %v495, %v495
    %v610 = vmul.f32 %v496, %v496
    %v613 = vrot.slane %v610, 7
    %v614 = vsel %vm101, %v613, %v609
    %v615 = vsel %vm69, %v614, 0
    %v618 = vsel %vm69, %v515, 0
    %620 = vmatprep.subr.mxu0 0.0
    %621 = vmatpush1.xpose.msra.mxu0 %v618
    %622 = vmatprep.subr.mxu0 0.0
    %623 = vmatpush1.xpose.msra.mxu0 %v109
    %624 = vmatprep.subr.mxu0 0.0
    %625 = vmatpush1.xpose.msra.mxu0 %v109
    %626 = vmatprep.subr.mxu0 0.0
    %627 = vmatpush1.xpose.msra.mxu0 %v109
    %628 = vmatprep.subr.mxu0 0.0
    %629 = vmatpush1.xpose.msra.mxu0 %v109
    %630 = vmatprep.subr.mxu0 0.0
    %631 = vmatpush1.xpose.msra.mxu0 %v109
    %632 = vmatprep.subr.mxu0 0.0
    %633 = vmatpush1.xpose.msra.mxu0 %v109
    %634 = vmatprep.subr.mxu0 0.0
    %635 = vmatpush1.xpose.msra.mxu0 %v109
    %636 = vmatprep.subr.mxu0 0.0
    %637 = vmatpush1.xpose.msra.mxu0 %v109
    %638 = vmatprep.subr.mxu0 0.0
    %639 = vmatpush1.xpose.msra.mxu0 %v109
    %640 = vmatprep.subr.mxu0 0.0
    %641 = vmatpush1.xpose.msra.mxu0 %v109
    %642 = vmatprep.subr.mxu0 0.0
    %643 = vmatpush1.xpose.msra.mxu0 %v109
    %644 = vmatprep.subr.mxu0 0.0
    %645 = vmatpush1.xpose.msra.mxu0 %v109
    %646 = vmatprep.subr.mxu0 0.0
    %647 = vmatpush1.xpose.msra.mxu0 %v109
    %648 = vmatprep.subr.mxu0 0.0
    %649 = vmatpush1.xpose.msra.mxu0 %v109
    %650 = vmatprep.subr.mxu0 0.0
    %651 = vmatpush1.xpose.msra.mxu0 %v109
    %652 = vmatprep.subr.mxu0 0.0
    %653 = vmatpush1.xpose.msra.mxu0 0.0
    %654 = vmatprep.subr.mxu0 0.0
    %655 = vmatpush1.xpose.msra.mxu0 0.0
    %656 = vmatprep.subr.mxu0 0.0
    %657 = vmatpush1.xpose.msra.mxu0 0.0
    %658 = vmatprep.subr.mxu0 0.0
    %659 = vmatpush1.xpose.msra.mxu0 0.0
    %660 = vmatprep.subr.mxu0 0.0
    %661 = vmatpush1.xpose.msra.mxu0 0.0
    %662 = vmatprep.subr.mxu0 0.0
    %663 = vmatpush1.xpose.msra.mxu0 0.0
    %664 = vmatprep.subr.mxu0 0.0
    %665 = vmatpush1.xpose.msra.mxu0 0.0
    %666 = vmatprep.subr.mxu0 0.0
    %667 = vmatpush1.xpose.msra.mxu0 0.0
    %668 = vmatprep.subr.mxu0 0.0
    %669 = vmatpush1.xpose.msra.mxu0 0.0
    %670 = vmatprep.subr.mxu0 0.0
    %671 = vmatpush1.xpose.msra.mxu0 0.0
    %672 = vmatprep.subr.mxu0 0.0
    %673 = vmatpush1.xpose.msra.mxu0 0.0
    %674 = vmatprep.subr.mxu0 0.0
    %675 = vmatpush1.xpose.msra.mxu0 0.0
    %676 = vmatprep.subr.mxu0 0.0
    %677 = vmatpush1.xpose.msra.mxu0 0.0
    %678 = vmatprep.subr.mxu0 0.0
    %679 = vmatpush1.xpose.msra.mxu0 0.0
    %680 = vmatprep.subr.mxu0 0.0
    %681 = vmatpush1.xpose.msra.mxu0 0.0
    %682 = vmatprep.subr.mxu0 0.0
    %683 = vmatpush1.xpose.msra.mxu0 0.0
    %684 = vmatprep.mubr.f32.mxu0 0.0
    %685 = vmatmul.mubr.f32.gmra.mrb[0].mxu0 %v615
    %v686 = vpop.f32.mrb[0].mxu0
    %v687 = vadd.f32 0.0, %v686
    %v688 = vpop.f32.mrb[0].mxu0
    %689 = vdwg.mxu0
    %v690 = vrsqrt.pop %v687
    %v691 = vmul.f32 %v687, %v690
    %vm692 = vcmp.eq.f32.partialorder %v687, inf
    %v693 = vsel %vm692, %v687, %v691
    %vm694 = vcmp.eq.f32.partialorder %v687, 0.0
    %v695 = vand.u32 %v687, 2147483648
    %v696 = vsel %vm694, %v695, %v693
    %v697 = vmax.f32 %v696, 1e-12
    %v698 = vrcp.pop %v697
    %v699 = vmul.f32 %v606, %v698
    %s700 = scalar_lea.vmem [#allocation8], 2
    %701 = vst [vmem:[%s700] sm:$0x3] %v699
    %v702 = vsub.f32 1.0, %v699
    %v703 = vsel %vm63, %v702, 0.0
    %v704 = vsel %vm275, %v703, 0.0
    %705 = vadd.xlane.f32.xlu0 %v704
    %v706 = vpop.xlane.xlu0 %705
    %v707 = vrot.slane %v706, 4
    %v708 = vadd.f32 %v706, %v707
    %v709 = vrot.slane %v708, 2
    %v710 = vadd.f32 %v708, %v709
    %v711 = vrot.slane %v710, 1
    %v712 = vadd.f32 %v710, %v711
    %s713 = vtos %v712
    %s714 = sadd.f32 %s286, %s713
    %v716 = vsel %vm69, %v514, 0
    %718 = vmatprep.subr.mxu0 0.0
    %719 = vmatpush1.xpose.msra.mxu0 %v716
    %720 = vmatprep.subr.mxu0 0.0
    %721 = vmatpush1.xpose.msra.mxu0 0.0
    %722 = vmatprep.subr.mxu0 0.0
    %723 = vmatpush1.xpose.msra.mxu0 0.0
    %724 = vmatprep.subr.mxu0 0.0
    %725 = vmatpush1.xpose.msra.mxu0 0.0
    %726 = vmatprep.subr.mxu0 0.0
    %727 = vmatpush1.xpose.msra.mxu0 0.0
    %728 = vmatprep.subr.mxu0 0.0
    %729 = vmatpush1.xpose.msra.mxu0 0.0
    %730 = vmatprep.subr.mxu0 0.0
    %731 = vmatpush1.xpose.msra.mxu0 0.0
    %732 = vmatprep.subr.mxu0 0.0
    %733 = vmatpush1.xpose.msra.mxu0 0.0
    %734 = vmatprep.subr.mxu0 0.0
    %735 = vmatpush1.xpose.msra.mxu0 0.0
    %736 = vmatprep.subr.mxu0 0.0
    %737 = vmatpush1.xpose.msra.mxu0 0.0
    %738 = vmatprep.subr.mxu0 0.0
    %739 = vmatpush1.xpose.msra.mxu0 0.0
    %740 = vmatprep.subr.mxu0 0.0
    %741 = vmatpush1.xpose.msra.mxu0 0.0
    %742 = vmatprep.subr.mxu0 0.0
    %743 = vmatpush1.xpose.msra.mxu0 0.0
    %744 = vmatprep.subr.mxu0 0.0
    %745 = vmatpush1.xpose.msra.mxu0 0.0
    %746 = vmatprep.subr.mxu0 0.0
    %747 = vmatpush1.xpose.msra.mxu0 0.0
    %748 = vmatprep.subr.mxu0 0.0
    %749 = vmatpush1.xpose.msra.mxu0 0.0
    %750 = vmatprep.subr.mxu0 0.0
    %751 = vmatpush1.xpose.msra.mxu0 0.0
    %752 = vmatprep.subr.mxu0 0.0
    %753 = vmatpush1.xpose.msra.mxu0 0.0
    %754 = vmatprep.subr.mxu0 0.0
    %755 = vmatpush1.xpose.msra.mxu0 0.0
    %756 = vmatprep.subr.mxu0 0.0
    %757 = vmatpush1.xpose.msra.mxu0 0.0
    %758 = vmatprep.subr.mxu0 0.0
    %759 = vmatpush1.xpose.msra.mxu0 0.0
    %760 = vmatprep.subr.mxu0 0.0
    %761 = vmatpush1.xpose.msra.mxu0 0.0
    %762 = vmatprep.subr.mxu0 0.0
    %763 = vmatpush1.xpose.msra.mxu0 0.0
    %764 = vmatprep.subr.mxu0 0.0
    %765 = vmatpush1.xpose.msra.mxu0 0.0
    %766 = vmatprep.subr.mxu0 0.0
    %767 = vmatpush1.xpose.msra.mxu0 0.0
    %768 = vmatprep.subr.mxu0 0.0
    %769 = vmatpush1.xpose.msra.mxu0 0.0
    %770 = vmatprep.subr.mxu0 0.0
    %771 = vmatpush1.xpose.msra.mxu0 0.0
    %772 = vmatprep.subr.mxu0 0.0
    %773 = vmatpush1.xpose.msra.mxu0 0.0
    %774 = vmatprep.subr.mxu0 0.0
    %775 = vmatpush1.xpose.msra.mxu0 0.0
    %776 = vmatprep.subr.mxu0 0.0
    %777 = vmatpush1.xpose.msra.mxu0 0.0
    %778 = vmatprep.subr.mxu0 0.0
    %779 = vmatpush1.xpose.msra.mxu0 0.0
    %780 = vmatprep.subr.mxu0 0.0
    %781 = vmatpush1.xpose.msra.mxu0 0.0
    %782 = vmatprep.mubr.f32.mxu0 0.0
    %783 = vmatmul.mubr.f32.gmra.mrb[0].mxu0 %v716
    %v784 = vpop.f32.mrb[0].mxu0
    %v785 = vadd.f32 0.0, %v784
    %v786 = vpop.f32.mrb[0].mxu0
    %787 = vdwg.mxu0
    %v789 = vsel %vm69, %v528, 0
    %791 = vmatprep.subr.mxu0 0.0
    %792 = vmatpush1.xpose.msra.mxu0 %v789
    %793 = vmatprep.subr.mxu0 0.0
    %794 = vmatpush1.xpose.msra.mxu0 0.0
    %795 = vmatprep.subr.mxu0 0.0
    %796 = vmatpush1.xpose.msra.mxu0 0.0
    %797 = vmatprep.subr.mxu0 0.0
    %798 = vmatpush1.xpose.msra.mxu0 0.0
    %799 = vmatprep.subr.mxu0 0.0
    %800 = vmatpush1.xpose.msra.mxu0 0.0
    %801 = vmatprep.subr.mxu0 0.0
    %802 = vmatpush1.xpose.msra.mxu0 0.0
    %803 = vmatprep.subr.mxu0 0.0
    %804 = vmatpush1.xpose.msra.mxu0 0.0
    %805 = vmatprep.subr.mxu0 0.0
    %806 = vmatpush1.xpose.msra.mxu0 0.0
    %807 = vmatprep.subr.mxu0 0.0
    %808 = vmatpush1.xpose.msra.mxu0 0.0
    %809 = vmatprep.subr.mxu0 0.0
    %810 = vmatpush1.xpose.msra.mxu0 0.0
    %811 = vmatprep.subr.mxu0 0.0
    %812 = vmatpush1.xpose.msra.mxu0 0.0
    %813 = vmatprep.subr.mxu0 0.0
    %814 = vmatpush1.xpose.msra.mxu0 0.0
    %815 = vmatprep.subr.mxu0 0.0
    %816 = vmatpush1.xpose.msra.mxu0 0.0
    %817 = vmatprep.subr.mxu0 0.0
    %818 = vmatpush1.xpose.msra.mxu0 0.0
    %819 = vmatprep.subr.mxu0 0.0
    %820 = vmatpush1.xpose.msra.mxu0 0.0
    %821 = vmatprep.subr.mxu0 0.0
    %822 = vmatpush1.xpose.msra.mxu0 0.0
    %823 = vmatprep.subr.mxu0 0.0
    %824 = vmatpush1.xpose.msra.mxu0 0.0
    %825 = vmatprep.subr.mxu0 0.0
    %826 = vmatpush1.xpose.msra.mxu0 0.0
    %827 = vmatprep.subr.mxu0 0.0
    %828 = vmatpush1.xpose.msra.mxu0 0.0
    %829 = vmatprep.subr.mxu0 0.0
    %830 = vmatpush1.xpose.msra.mxu0 0.0
    %831 = vmatprep.subr.mxu0 0.0
    %832 = vmatpush1.xpose.msra.mxu0 0.0
    %833 = vmatprep.subr.mxu0 0.0
    %834 = vmatpush1.xpose.msra.mxu0 0.0
    %835 = vmatprep.subr.mxu0 0.0
    %836 = vmatpush1.xpose.msra.mxu0 0.0
    %837 = vmatprep.subr.mxu0 0.0
    %838 = vmatpush1.xpose.msra.mxu0 0.0
    %839 = vmatprep.subr.mxu0 0.0
    %840 = vmatpush1.xpose.msra.mxu0 0.0
    %841 = vmatprep.subr.mxu0 0.0
    %842 = vmatpush1.xpose.msra.mxu0 0.0
    %843 = vmatprep.subr.mxu0 0.0
    %844 = vmatpush1.xpose.msra.mxu0 0.0
    %845 = vmatprep.subr.mxu0 0.0
    %846 = vmatpush1.xpose.msra.mxu0 0.0
    %847 = vmatprep.subr.mxu0 0.0
    %848 = vmatpush1.xpose.msra.mxu0 0.0
    %849 = vmatprep.subr.mxu0 0.0
    %850 = vmatpush1.xpose.msra.mxu0 0.0
    %851 = vmatprep.subr.mxu0 0.0
    %852 = vmatpush1.xpose.msra.mxu0 0.0
    %853 = vmatprep.subr.mxu0 0.0
    %854 = vmatpush1.xpose.msra.mxu0 0.0
    %855 = vmatprep.mubr.f32.mxu0 0.0
    %856 = vmatmul.mubr.f32.gmra.mrb[0].mxu0 %v789
    %v857 = vpop.f32.mrb[0].mxu0
    %v858 = vadd.f32 0.0, %v857
    %v859 = vpop.f32.mrb[0].mxu0
    %860 = vdwg.mxu0
    %v861 = vsub.f32 %v785, %v52
    %v862 = vsub.f32 %v858, %v52
    %v863 = vmul.f32 %v861, %v861
    %v864 = vsel %vm59, %v863, 0.0
    %v865 = vsel %vm437, %v864, 0.0
    %866 = vadd.xlane.f32.xlu0 %v865
    %v867 = vpop.xlane.xlu0 %866
    %v868 = vrot.slane %v867, 4
    %v869 = vadd.f32 %v867, %v868
    %v870 = vrot.slane %v869, 2
    %v871 = vadd.f32 %v869, %v870
    %v872 = vrot.slane %v871, 1
    %v873 = vadd.f32 %v871, %v872
    %s874 = vtos %v873
    %v875 = vmul.f32 %v862, %v862
    %v876 = vsel %vm59, %v875, 0.0
    %v877 = vsel %vm437, %v876, 0.0
    %878 = vadd.xlane.f32.xlu0 %v877
    %v879 = vpop.xlane.xlu0 %878
    %v880 = vrot.slane %v879, 4
    %v881 = vadd.f32 %v879, %v880
    %v882 = vrot.slane %v881, 2
    %v883 = vadd.f32 %v881, %v882
    %v884 = vrot.slane %v883, 1
    %v885 = vadd.f32 %v883, %v884
    %s886 = vtos %v885
    %s887 = sadd.f32 %s874, %s886
    %v888 = vrcp.pop 4.0
    %s889 = vtos %v888
    %s890 = smul.f32 %s887, %s889
    %s891 = smul.f32 %s890, 1e-06
    %s892 = sadd.f32 %s465, %s891
    %v893 = vmul.f32 %v785, %v785
    %v894 = vsel %vm62, %v893, 0.0
    %v895 = vsel %vm437, %v894, 0.0
    %896 = vadd.xlane.f32.xlu0 %v895
    %v897 = vpop.xlane.xlu0 %896
    %v898 = vrot.slane %v897, 4
    %v899 = vadd.f32 %v897, %v898
    %v900 = vrot.slane %v899, 2
    %v901 = vadd.f32 %v899, %v900
    %v902 = vrot.slane %v901, 1
    %v903 = vadd.f32 %v901, %v902
    %s904 = vtos %v903
    %v905 = vmul.f32 %v858, %v858
    %v906 = vsel %vm62, %v905, 0.0
    %v907 = vsel %vm437, %v906, 0.0
    %908 = vadd.xlane.f32.xlu0 %v907
    %v909 = vpop.xlane.xlu0 %908
    %v910 = vrot.slane %v909, 4
    %v911 = vadd.f32 %v909, %v910
    %v912 = vrot.slane %v911, 2
    %v913 = vadd.f32 %v911, %v912
    %v914 = vrot.slane %v913, 1
    %v915 = vadd.f32 %v913, %v914
    %s916 = vtos %v915
    %s917 = sadd.f32 %s904, %s916
    %v918 = vrcp.pop 4.0
    %s919 = vtos %v918
    %s920 = smul.f32 %s917, %s919
    %s921 = sadd.f32 %s494, %s920
    %v922 = vld [vmem:[%s0 + $0x2] sm:$0x1]
    %v923 = vld [vmem:[%s0 + $0x6] sm:$0x1]
    %s924 = scalar_lea.vmem [#allocation2], 16
    %v925 = vld [vmem:[%s924] sm:$0xff]
    %s926 = scalar_lea.vmem [#allocation6], 16
    %v927 = vld [vmem:[%s926] sm:$0xff]
    %v928 = vmul.f32 %v925, %v925
    %v929 = vsel %vm69, %v928, 0.0
    %930 = vadd.xlane.f32.xlu0 %v929
    %v931 = vpop.xlane.xlu0 %930
    %v932 = vrsqrt.pop %v931
    %v933 = vmul.f32 %v931, %v932
    %vm934 = vcmp.eq.f32.partialorder %v931, inf
    %v935 = vsel %vm934, %v931, %v933
    %vm936 = vcmp.eq.f32.partialorder %v931, 0.0
    %v937 = vand.u32 %v931, 2147483648
    %v938 = vsel %vm936, %v937, %v935
    %v939 = vmax.f32 %v938, 1e-12
    %v940 = vrcp.pop %v939
    %v941 = vmul.f32 %v925, %v940
    %v942 = vmul.f32 %v927, %v927
    %v943 = vsel %vm69, %v942, 0.0
    %944 = vadd.xlane.f32.xlu0 %v943
    %v945 = vpop.xlane.xlu0 %944
    %v946 = vrsqrt.pop %v945
    %v947 = vmul.f32 %v945, %v946
    %vm948 = vcmp.eq.f32.partialorder %v945, inf
    %v949 = vsel %vm948, %v945, %v947
    %vm950 = vcmp.eq.f32.partialorder %v945, 0.0
    %v951 = vand.u32 %v945, 2147483648
    %v952 = vsel %vm950, %v951, %v949
    %v953 = vmax.f32 %v952, 1e-12
    %v954 = vrcp.pop %v953
    %v955 = vmul.f32 %v927, %v954
    %v956 = vmul.f32 %v927, %v941
    %v959 = vrot.slane %v923, 7
    %v960 = vsel %vm101, %v959, %v922
    %v961 = vsel %vm69, %v960, 0
    %v964 = vsel %vm69, %v956, 0
    %966 = vmatprep.subr.mxu0 0.0
    %967 = vmatpush1.xpose.msra.mxu0 %v964
    %968 = vmatprep.subr.mxu0 0.0
    %969 = vmatpush1.xpose.msra.mxu0 %v109
    %970 = vmatprep.subr.mxu0 0.0
    %971 = vmatpush1.xpose.msra.mxu0 %v109
    %972 = vmatprep.subr.mxu0 0.0
    %973 = vmatpush1.xpose.msra.mxu0 %v109
    %974 = vmatprep.subr.mxu0 0.0
    %975 = vmatpush1.xpose.msra.mxu0 %v109
    %976 = vmatprep.subr.mxu0 0.0
    %977 = vmatpush1.xpose.msra.mxu0 %v109
    %978 = vmatprep.subr.mxu0 0.0
    %979 = vmatpush1.xpose.msra.mxu0 %v109
    %980 = vmatprep.subr.mxu0 0.0
    %981 = vmatpush1.xpose.msra.mxu0 %v109
    %982 = vmatprep.subr.mxu0 0.0
    %983 = vmatpush1.xpose.msra.mxu0 %v109
    %984 = vmatprep.subr.mxu0 0.0
    %985 = vmatpush1.xpose.msra.mxu0 %v109
    %986 = vmatprep.subr.mxu0 0.0
    %987 = vmatpush1.xpose.msra.mxu0 %v109
    %988 = vmatprep.subr.mxu0 0.0
    %989 = vmatpush1.xpose.msra.mxu0 %v109
    %990 = vmatprep.subr.mxu0 0.0
    %991 = vmatpush1.xpose.msra.mxu0 %v109
    %992 = vmatprep.subr.mxu0 0.0
    %993 = vmatpush1.xpose.msra.mxu0 %v109
    %994 = vmatprep.subr.mxu0 0.0
    %995 = vmatpush1.xpose.msra.mxu0 %v109
    %996 = vmatprep.subr.mxu0 0.0
    %997 = vmatpush1.xpose.msra.mxu0 %v109
    %998 = vmatprep.subr.mxu0 0.0
    %999 = vmatpush1.xpose.msra.mxu0 0.0
    %1000 = vmatprep.subr.mxu0 0.0
    %1001 = vmatpush1.xpose.msra.mxu0 0.0
    %1002 = vmatprep.subr.mxu0 0.0
    %1003 = vmatpush1.xpose.msra.mxu0 0.0
    %1004 = vmatprep.subr.mxu0 0.0
    %1005 = vmatpush1.xpose.msra.mxu0 0.0
    %1006 = vmatprep.subr.mxu0 0.0
    %1007 = vmatpush1.xpose.msra.mxu0 0.0
    %1008 = vmatprep.subr.mxu0 0.0
    %1009 = vmatpush1.xpose.msra.mxu0 0.0
    %1010 = vmatprep.subr.mxu0 0.0
    %1011 = vmatpush1.xpose.msra.mxu0 0.0
    %1012 = vmatprep.subr.mxu0 0.0
    %1013 = vmatpush1.xpose.msra.mxu0 0.0
    %1014 = vmatprep.subr.mxu0 0.0
    %1015 = vmatpush1.xpose.msra.mxu0 0.0
    %1016 = vmatprep.subr.mxu0 0.0
    %1017 = vmatpush1.xpose.msra.mxu0 0.0
    %1018 = vmatprep.subr.mxu0 0.0
    %1019 = vmatpush1.xpose.msra.mxu0 0.0
    %1020 = vmatprep.subr.mxu0 0.0
    %1021 = vmatpush1.xpose.msra.mxu0 0.0
    %1022 = vmatprep.subr.mxu0 0.0
    %1023 = vmatpush1.xpose.msra.mxu0 0.0
    %1024 = vmatprep.subr.mxu0 0.0
    %1025 = vmatpush1.xpose.msra.mxu0 0.0
    %1026 = vmatprep.subr.mxu0 0.0
    %1027 = vmatpush1.xpose.msra.mxu0 0.0
    %1028 = vmatprep.subr.mxu0 0.0
    %1029 = vmatpush1.xpose.msra.mxu0 0.0
    %1030 = vmatprep.mubr.f32.mxu0 0.0
    %1031 = vmatmul.mubr.f32.gmra.mrb[0].mxu0 %v961
    %v1032 = vpop.f32.mrb[0].mxu0
    %v1033 = vadd.f32 0.0, %v1032
    %v1034 = vpop.f32.mrb[0].mxu0
    %1035 = vdwg.mxu0
    %v1036 = vmul.f32 %v922, %v922
    %v1037 = vmul.f32 %v923, %v923
    %v1040 = vrot.slane %v1037, 7
    %v1041 = vsel %vm101, %v1040, %v1036
    %v1042 = vsel %vm69, %v1041, 0
    %v1045 = vsel %vm69, %v942, 0
    %1047 = vmatprep.subr.mxu0 0.0
    %1048 = vmatpush1.xpose.msra.mxu0 %v1045
    %1049 = vmatprep.subr.mxu0 0.0
    %1050 = vmatpush1.xpose.msra.mxu0 %v109
    %1051 = vmatprep.subr.mxu0 0.0
    %1052 = vmatpush1.xpose.msra.mxu0 %v109
    %1053 = vmatprep.subr.mxu0 0.0
    %1054 = vmatpush1.xpose.msra.mxu0 %v109
    %1055 = vmatprep.subr.mxu0 0.0
    %1056 = vmatpush1.xpose.msra.mxu0 %v109
    %1057 = vmatprep.subr.mxu0 0.0
    %1058 = vmatpush1.xpose.msra.mxu0 %v109
    %1059 = vmatprep.subr.mxu0 0.0
    %1060 = vmatpush1.xpose.msra.mxu0 %v109
    %1061 = vmatprep.subr.mxu0 0.0
    %1062 = vmatpush1.xpose.msra.mxu0 %v109
    %1063 = vmatprep.subr.mxu0 0.0
    %1064 = vmatpush1.xpose.msra.mxu0 %v109
    %1065 = vmatprep.subr.mxu0 0.0
    %1066 = vmatpush1.xpose.msra.mxu0 %v109
    %1067 = vmatprep.subr.mxu0 0.0
    %1068 = vmatpush1.xpose.msra.mxu0 %v109
    %1069 = vmatprep.subr.mxu0 0.0
    %1070 = vmatpush1.xpose.msra.mxu0 %v109
    %1071 = vmatprep.subr.mxu0 0.0
    %1072 = vmatpush1.xpose.msra.mxu0 %v109
    %1073 = vmatprep.subr.mxu0 0.0
    %1074 = vmatpush1.xpose.msra.mxu0 %v109
    %1075 = vmatprep.subr.mxu0 0.0
    %1076 = vmatpush1.xpose.msra.mxu0 %v109
    %1077 = vmatprep.subr.mxu0 0.0
    %1078 = vmatpush1.xpose.msra.mxu0 %v109
    %1079 = vmatprep.subr.mxu0 0.0
    %1080 = vmatpush1.xpose.msra.mxu0 0.0
    %1081 = vmatprep.subr.mxu0 0.0
    %1082 = vmatpush1.xpose.msra.mxu0 0.0
    %1083 = vmatprep.subr.mxu0 0.0
    %1084 = vmatpush1.xpose.msra.mxu0 0.0
    %1085 = vmatprep.subr.mxu0 0.0
    %1086 = vmatpush1.xpose.msra.mxu0 0.0
    %1087 = vmatprep.subr.mxu0 0.0
    %1088 = vmatpush1.xpose.msra.mxu0 0.0
    %1089 = vmatprep.subr.mxu0 0.0
    %1090 = vmatpush1.xpose.msra.mxu0 0.0
    %1091 = vmatprep.subr.mxu0 0.0
    %1092 = vmatpush1.xpose.msra.mxu0 0.0
    %1093 = vmatprep.subr.mxu0 0.0
    %1094 = vmatpush1.xpose.msra.mxu0 0.0
    %1095 = vmatprep.subr.mxu0 0.0
    %1096 = vmatpush1.xpose.msra.mxu0 0.0
    %1097 = vmatprep.subr.mxu0 0.0
    %1098 = vmatpush1.xpose.msra.mxu0 0.0
    %1099 = vmatprep.subr.mxu0 0.0
    %1100 = vmatpush1.xpose.msra.mxu0 0.0
    %1101 = vmatprep.subr.mxu0 0.0
    %1102 = vmatpush1.xpose.msra.mxu0 0.0
    %1103 = vmatprep.subr.mxu0 0.0
    %1104 = vmatpush1.xpose.msra.mxu0 0.0
    %1105 = vmatprep.subr.mxu0 0.0
    %1106 = vmatpush1.xpose.msra.mxu0 0.0
    %1107 = vmatprep.subr.mxu0 0.0
    %1108 = vmatpush1.xpose.msra.mxu0 0.0
    %1109 = vmatprep.subr.mxu0 0.0
    %1110 = vmatpush1.xpose.msra.mxu0 0.0
    %1111 = vmatprep.mubr.f32.mxu0 0.0
    %1112 = vmatmul.mubr.f32.gmra.mrb[0].mxu0 %v1042
    %v1113 = vpop.f32.mrb[0].mxu0
    %v1114 = vadd.f32 0.0, %v1113
    %v1115 = vpop.f32.mrb[0].mxu0
    %1116 = vdwg.mxu0
    %v1117 = vrsqrt.pop %v1114
    %v1118 = vmul.f32 %v1114, %v1117
    %vm1119 = vcmp.eq.f32.partialorder %v1114, inf
    %v1120 = vsel %vm1119, %v1114, %v1118
    %vm1121 = vcmp.eq.f32.partialorder %v1114, 0.0
    %v1122 = vand.u32 %v1114, 2147483648
    %v1123 = vsel %vm1121, %v1122, %v1120
    %v1124 = vmax.f32 %v1123, 1e-12
    %v1125 = vrcp.pop %v1124
    %v1126 = vmul.f32 %v1033, %v1125
    %s1127 = scalar_lea.vmem [#allocation8], 4
    %1128 = vst [vmem:[%s1127] sm:$0x3] %v1126
    %v1129 = vsub.f32 1.0, %v1126
    %v1130 = vsel %vm63, %v1129, 0.0
    %v1131 = vsel %vm275, %v1130, 0.0
    %1132 = vadd.xlane.f32.xlu0 %v1131
    %v1133 = vpop.xlane.xlu0 %1132
    %v1134 = vrot.slane %v1133, 4
    %v1135 = vadd.f32 %v1133, %v1134
    %v1136 = vrot.slane %v1135, 2
    %v1137 = vadd.f32 %v1135, %v1136
    %v1138 = vrot.slane %v1137, 1
    %v1139 = vadd.f32 %v1137, %v1138
    %s1140 = vtos %v1139
    %s1141 = sadd.f32 %s714, %s1140
    %v1143 = vsel %vm69, %v941, 0
    %1145 = vmatprep.subr.mxu0 0.0
    %1146 = vmatpush1.xpose.msra.mxu0 %v1143
    %1147 = vmatprep.subr.mxu0 0.0
    %1148 = vmatpush1.xpose.msra.mxu0 0.0
    %1149 = vmatprep.subr.mxu0 0.0
    %1150 = vmatpush1.xpose.msra.mxu0 0.0
    %1151 = vmatprep.subr.mxu0 0.0
    %1152 = vmatpush1.xpose.msra.mxu0 0.0
    %1153 = vmatprep.subr.mxu0 0.0
    %1154 = vmatpush1.xpose.msra.mxu0 0.0
    %1155 = vmatprep.subr.mxu0 0.0
    %1156 = vmatpush1.xpose.msra.mxu0 0.0
    %1157 = vmatprep.subr.mxu0 0.0
    %1158 = vmatpush1.xpose.msra.mxu0 0.0
    %1159 = vmatprep.subr.mxu0 0.0
    %1160 = vmatpush1.xpose.msra.mxu0 0.0
    %1161 = vmatprep.subr.mxu0 0.0
    %1162 = vmatpush1.xpose.msra.mxu0 0.0
    %1163 = vmatprep.subr.mxu0 0.0
    %1164 = vmatpush1.xpose.msra.mxu0 0.0
    %1165 = vmatprep.subr.mxu0 0.0
    %1166 = vmatpush1.xpose.msra.mxu0 0.0
    %1167 = vmatprep.subr.mxu0 0.0
    %1168 = vmatpush1.xpose.msra.mxu0 0.0
    %1169 = vmatprep.subr.mxu0 0.0
    %1170 = vmatpush1.xpose.msra.mxu0 0.0
    %1171 = vmatprep.subr.mxu0 0.0
    %1172 = vmatpush1.xpose.msra.mxu0 0.0
    %1173 = vmatprep.subr.mxu0 0.0
    %1174 = vmatpush1.xpose.msra.mxu0 0.0
    %1175 = vmatprep.subr.mxu0 0.0
    %1176 = vmatpush1.xpose.msra.mxu0 0.0
    %1177 = vmatprep.subr.mxu0 0.0
    %1178 = vmatpush1.xpose.msra.mxu0 0.0
    %1179 = vmatprep.subr.mxu0 0.0
    %1180 = vmatpush1.xpose.msra.mxu0 0.0
    %1181 = vmatprep.subr.mxu0 0.0
    %1182 = vmatpush1.xpose.msra.mxu0 0.0
    %1183 = vmatprep.subr.mxu0 0.0
    %1184 = vmatpush1.xpose.msra.mxu0 0.0
    %1185 = vmatprep.subr.mxu0 0.0
    %1186 = vmatpush1.xpose.msra.mxu0 0.0
    %1187 = vmatprep.subr.mxu0 0.0
    %1188 = vmatpush1.xpose.msra.mxu0 0.0
    %1189 = vmatprep.subr.mxu0 0.0
    %1190 = vmatpush1.xpose.msra.mxu0 0.0
    %1191 = vmatprep.subr.mxu0 0.0
    %1192 = vmatpush1.xpose.msra.mxu0 0.0
    %1193 = vmatprep.subr.mxu0 0.0
    %1194 = vmatpush1.xpose.msra.mxu0 0.0
    %1195 = vmatprep.subr.mxu0 0.0
    %1196 = vmatpush1.xpose.msra.mxu0 0.0
    %1197 = vmatprep.subr.mxu0 0.0
    %1198 = vmatpush1.xpose.msra.mxu0 0.0
    %1199 = vmatprep.subr.mxu0 0.0
    %1200 = vmatpush1.xpose.msra.mxu0 0.0
    %1201 = vmatprep.subr.mxu0 0.0
    %1202 = vmatpush1.xpose.msra.mxu0 0.0
    %1203 = vmatprep.subr.mxu0 0.0
    %1204 = vmatpush1.xpose.msra.mxu0 0.0
    %1205 = vmatprep.subr.mxu0 0.0
    %1206 = vmatpush1.xpose.msra.mxu0 0.0
    %1207 = vmatprep.subr.mxu0 0.0
    %1208 = vmatpush1.xpose.msra.mxu0 0.0
    %1209 = vmatprep.mubr.f32.mxu0 0.0
    %1210 = vmatmul.mubr.f32.gmra.mrb[0].mxu0 %v1143
    %v1211 = vpop.f32.mrb[0].mxu0
    %v1212 = vadd.f32 0.0, %v1211
    %v1213 = vpop.f32.mrb[0].mxu0
    %1214 = vdwg.mxu0
    %v1216 = vsel %vm69, %v955, 0
    %1218 = vmatprep.subr.mxu0 0.0
    %1219 = vmatpush1.xpose.msra.mxu0 %v1216
    %1220 = vmatprep.subr.mxu0 0.0
    %1221 = vmatpush1.xpose.msra.mxu0 0.0
    %1222 = vmatprep.subr.mxu0 0.0
    %1223 = vmatpush1.xpose.msra.mxu0 0.0
    %1224 = vmatprep.subr.mxu0 0.0
    %1225 = vmatpush1.xpose.msra.mxu0 0.0
    %1226 = vmatprep.subr.mxu0 0.0
    %1227 = vmatpush1.xpose.msra.mxu0 0.0
    %1228 = vmatprep.subr.mxu0 0.0
    %1229 = vmatpush1.xpose.msra.mxu0 0.0
    %1230 = vmatprep.subr.mxu0 0.0
    %1231 = vmatpush1.xpose.msra.mxu0 0.0
    %1232 = vmatprep.subr.mxu0 0.0
    %1233 = vmatpush1.xpose.msra.mxu0 0.0
    %1234 = vmatprep.subr.mxu0 0.0
    %1235 = vmatpush1.xpose.msra.mxu0 0.0
    %1236 = vmatprep.subr.mxu0 0.0
    %1237 = vmatpush1.xpose.msra.mxu0 0.0
    %1238 = vmatprep.subr.mxu0 0.0
    %1239 = vmatpush1.xpose.msra.mxu0 0.0
    %1240 = vmatprep.subr.mxu0 0.0
    %1241 = vmatpush1.xpose.msra.mxu0 0.0
    %1242 = vmatprep.subr.mxu0 0.0
    %1243 = vmatpush1.xpose.msra.mxu0 0.0
    %1244 = vmatprep.subr.mxu0 0.0
    %1245 = vmatpush1.xpose.msra.mxu0 0.0
    %1246 = vmatprep.subr.mxu0 0.0
    %1247 = vmatpush1.xpose.msra.mxu0 0.0
    %1248 = vmatprep.subr.mxu0 0.0
    %1249 = vmatpush1.xpose.msra.mxu0 0.0
    %1250 = vmatprep.subr.mxu0 0.0
    %1251 = vmatpush1.xpose.msra.mxu0 0.0
    %1252 = vmatprep.subr.mxu0 0.0
    %1253 = vmatpush1.xpose.msra.mxu0 0.0
    %1254 = vmatprep.subr.mxu0 0.0
    %1255 = vmatpush1.xpose.msra.mxu0 0.0
    %1256 = vmatprep.subr.mxu0 0.0
    %1257 = vmatpush1.xpose.msra.mxu0 0.0
    %1258 = vmatprep.subr.mxu0 0.0
    %1259 = vmatpush1.xpose.msra.mxu0 0.0
    %1260 = vmatprep.subr.mxu0 0.0
    %1261 = vmatpush1.xpose.msra.mxu0 0.0
    %1262 = vmatprep.subr.mxu0 0.0
    %1263 = vmatpush1.xpose.msra.mxu0 0.0
    %1264 = vmatprep.subr.mxu0 0.0
    %1265 = vmatpush1.xpose.msra.mxu0 0.0
    %1266 = vmatprep.subr.mxu0 0.0
    %1267 = vmatpush1.xpose.msra.mxu0 0.0
    %1268 = vmatprep.subr.mxu0 0.0
    %1269 = vmatpush1.xpose.msra.mxu0 0.0
    %1270 = vmatprep.subr.mxu0 0.0
    %1271 = vmatpush1.xpose.msra.mxu0 0.0
    %1272 = vmatprep.subr.mxu0 0.0
    %1273 = vmatpush1.xpose.msra.mxu0 0.0
    %1274 = vmatprep.subr.mxu0 0.0
    %1275 = vmatpush1.xpose.msra.mxu0 0.0
    %1276 = vmatprep.subr.mxu0 0.0
    %1277 = vmatpush1.xpose.msra.mxu0 0.0
    %1278 = vmatprep.subr.mxu0 0.0
    %1279 = vmatpush1.xpose.msra.mxu0 0.0
    %1280 = vmatprep.subr.mxu0 0.0
    %1281 = vmatpush1.xpose.msra.mxu0 0.0
    %1282 = vmatprep.mubr.f32.mxu0 0.0
    %1283 = vmatmul.mubr.f32.gmra.mrb[0].mxu0 %v1216
    %v1284 = vpop.f32.mrb[0].mxu0
    %v1285 = vadd.f32 0.0, %v1284
    %v1286 = vpop.f32.mrb[0].mxu0
    %1287 = vdwg.mxu0
    %v1288 = vsub.f32 %v1212, %v52
    %v1289 = vsub.f32 %v1285, %v52
    %v1290 = vmul.f32 %v1288, %v1288
    %v1291 = vsel %vm59, %v1290, 0.0
    %v1292 = vsel %vm437, %v1291, 0.0
    %1293 = vadd.xlane.f32.xlu0 %v1292
    %v1294 = vpop.xlane.xlu0 %1293
    %v1295 = vrot.slane %v1294, 4
    %v1296 = vadd.f32 %v1294, %v1295
    %v1297 = vrot.slane %v1296, 2
    %v1298 = vadd.f32 %v1296, %v1297
    %v1299 = vrot.slane %v1298, 1
    %v1300 = vadd.f32 %v1298, %v1299
    %s1301 = vtos %v1300
    %v1302 = vmul.f32 %v1289, %v1289
    %v1303 = vsel %vm59, %v1302, 0.0
    %v1304 = vsel %vm437, %v1303, 0.0
    %1305 = vadd.xlane.f32.xlu0 %v1304
    %v1306 = vpop.xlane.xlu0 %1305
    %v1307 = vrot.slane %v1306, 4
    %v1308 = vadd.f32 %v1306, %v1307
    %v1309 = vrot.slane %v1308, 2
    %v1310 = vadd.f32 %v1308, %v1309
    %v1311 = vrot.slane %v1310, 1
    %v1312 = vadd.f32 %v1310, %v1311
    %s1313 = vtos %v1312
    %s1314 = sadd.f32 %s1301, %s1313
    %v1315 = vrcp.pop 4.0
    %s1316 = vtos %v1315
    %s1317 = smul.f32 %s1314, %s1316
    %s1318 = smul.f32 %s1317, 1e-06
    %s1319 = sadd.f32 %s892, %s1318
    %v1320 = vmul.f32 %v1212, %v1212
    %v1321 = vsel %vm62, %v1320, 0.0
    %v1322 = vsel %vm437, %v1321, 0.0
    %1323 = vadd.xlane.f32.xlu0 %v1322
    %v1324 = vpop.xlane.xlu0 %1323
    %v1325 = vrot.slane %v1324, 4
    %v1326 = vadd.f32 %v1324, %v1325
    %v1327 = vrot.slane %v1326, 2
    %v1328 = vadd.f32 %v1326, %v1327
    %v1329 = vrot.slane %v1328, 1
    %v1330 = vadd.f32 %v1328, %v1329
    %s1331 = vtos %v1330
    %v1332 = vmul.f32 %v1285, %v1285
    %v1333 = vsel %vm62, %v1332, 0.0
    %v1334 = vsel %vm437, %v1333, 0.0
    %1335 = vadd.xlane.f32.xlu0 %v1334
    %v1336 = vpop.xlane.xlu0 %1335
    %v1337 = vrot.slane %v1336, 4
    %v1338 = vadd.f32 %v1336, %v1337
    %v1339 = vrot.slane %v1338, 2
    %v1340 = vadd.f32 %v1338, %v1339
    %v1341 = vrot.slane %v1340, 1
    %v1342 = vadd.f32 %v1340, %v1341
    %s1343 = vtos %v1342
    %s1344 = sadd.f32 %s1331, %s1343
    %v1345 = vrcp.pop 4.0
    %s1346 = vtos %v1345
    %s1347 = smul.f32 %s1344, %s1346
    %s1348 = sadd.f32 %s921, %s1347
    %s1349 = scalar_lea.smem [#allocation9], 0
    %1350 = sst [smem:[%s1349]] %s1141
    %s1351 = scalar_lea.smem [#allocation9], 1
    %1352 = sst [smem:[%s1351]] %s1319
    %s1353 = scalar_lea.smem [#allocation9], 2
    %1354 = sst [smem:[%s1353]] %s1348
    // Predicated region
    $region22: #{tpu_custom_call.1} parent=1 // pred_check
      _
    $region23: #{tpu_custom_call.1} parent=1 // pred_check_branch
      %1356 = sbr.rel (0) target = $region25
    $region24: #{tpu_custom_call.1} parent=1 // pred_region
      %s1358 = ssub.s32 96, 96
      %1359 = vsyncadd [#allocation4], %s1358
      %s1360 = sshll.u32 [#allocation8], 4
      %s1361 = int_to_ptr.vmem [resolvable:$true] %s1360
      %1366 = dma.vmem_to_hbm [thread:$0]  %s1361, 96, %s3, [#allocation4], 32, 32, 2
    $region25: #{tpu_custom_call.1} parent=1 // pred_fallthru
      _
    // Predicated region
    $region26: #{tpu_custom_call.1} parent=1 // pred_check
      _
    $region27: #{tpu_custom_call.1} parent=1 // pred_check_branch
      %1368 = sbr.rel (0) target = $region29
    $region28: #{tpu_custom_call.1} parent=1 // pred_region
      %s1370 = ssub.s32 16, 16
      %1371 = vsyncadd [#allocation5], %s1370
      %1374 = dma.smem_to_hbm [#allocation9], 16, %s4, [#allocation5]
    $region29: #{tpu_custom_call.1} parent=1 // pred_fallthru
      _
    // Predicated region
    $region30: #{tpu_custom_call.1} parent=1 // pred_check
      _
    $region31: #{tpu_custom_call.1} parent=1 // pred_check_branch
      %1376 = sbr.rel (0) target = $region33
    $region32: #{tpu_custom_call.1} parent=1 // pred_region
      %1377 = dma.done [#allocation4], 96
    $region33: #{tpu_custom_call.1} parent=1 // pred_fallthru
      _
    // Predicated region
    $region34: #{tpu_custom_call.1} parent=1 // pred_check
      _
    $region35: #{tpu_custom_call.1} parent=1 // pred_check_branch
      %1379 = sbr.rel (0) target = $region37
    $region36: #{tpu_custom_call.1} parent=1 // pred_region
      %1380 = dma.done [#allocation5], 16
    $region37: #{tpu_custom_call.1} parent=1 // pred_fallthru
      _
    %1381 = sfence
    %1382 = vsyncpa [#allocation3], 1
    %1383 = vsyncpa [#allocation7], 1
    %1384 = vsyncpa [#allocation4], 1
    %1385 = vsyncpa [#allocation5], 1

</llo_original>
